<compile_context>
chip_gen: v5e
topology: v5e:2x2
jax: 0.10.0
libtpu: 0.0.40
codegen_flags: <defaults>
</compile_context>

<pallas_src>
import functools

import jax
import jax.numpy as jnp
from jax import lax
from jax.experimental import pallas as pl
from jax.experimental.pallas import tpu as pltpu


# ---------------------------------------------------------------------------
# SpatialAttention: Pallas TPU kernel
# ---------------------------------------------------------------------------
def _roll_lanes(arr, shift, n):
    """Lane roll along axis=1: out[f] = arr[(f - shift) mod n]; no-op if 0."""
    shift = shift % n
    if shift == 0:
        return arr
    return pltpu.roll(arr, shift=shift, axis=1)


def _spatial_attention_kernel(x_ref, masks_ref, wv_ref, o_ref, *, Bt, C, W, HWp):
    """sigmoid(y) * y, y = 7x7 / pad-3 conv over [channel-max ; channel-mean].

    x_ref    : (Bt, C, HWp)   features, flat row-major spatial axis (lane-dense,
                              HWp = H*W padded up to a multiple of 128).
    masks_ref: (14, HWp)      rows 0..6  -> row-boundary masks (per kh),
                              rows 7..13 -> col-boundary masks (per kw),
                              evaluated at *output* positions; they zero every
                              out-of-image tap and every wrapped / pad read.
    wv_ref   : (49, 2*Bt, 1)  per-tap per-sublane weights: first Bt sublanes get
                              w[0, kh, kw] (max channel), last Bt sublanes get
                              w[1, kh, kw] / C (mean channel, 1/C folded in).
    o_ref    : (Bt, 1, HWp)   output block (lane-dense store).
    """
    f32 = jnp.float32

    # Streaming channel reduction: running max + running sum, one (Bt, HWp)
    # slice upcast at a time (no full (Bt, C, HWp) f32 copy of the block).
    x0 = x_ref[:, 0, :].astype(f32)
    m, s = x0, x0
    for c in range(1, C):
        xc = x_ref[:, c, :].astype(f32)
        m = jnp.maximum(m, xc)
        s = s + xc

    # Stack [max ; sum] along sublanes: one roll / FMA covers both channels.
    p = jnp.concatenate([m, s], axis=0)                      # (2*Bt, HWp)

    acc = jnp.zeros((2 * Bt, HWp), f32)
    # band_src for kh=0: band_src[f] = p[f - 3*W]; advanced by +W per kh step.
    band_src = _roll_lanes(p, 3 * W, HWp)
    for kh in range(7):
        row_mask = masks_ref[pl.ds(kh, 1), :]                # (1, HWp)
        band = band_src * row_mask
        # cur for kw=0: cur[f] = band[f - 3]; advanced incrementally by +1 per
        # kw step, so a single rolled temporary stays live (bounded liveness).
        cur = _roll_lanes(band, 3, HWp)
        for kw in range(7):
            col_mask = masks_ref[pl.ds(7 + kw, 1), :]        # (1, HWp)
            acc = acc + (cur * wv_ref[kh * 7 + kw]) * col_mask
            if kw < 6:
                cur = _roll_lanes(cur, -1, HWp)
        if kh < 6:
            band_src = _roll_lanes(band_src, -W, HWp)

    # Sum the two stacked channel halves, then sigmoid(conv) * conv.
    conv = acc[:Bt] + acc[Bt:]                               # (Bt, HWp)
    out = jax.nn.sigmoid(conv) * conv
    o_ref[:, 0, :] = out.astype(o_ref.dtype)


def _build_boundary_masks(H, W, HWp):
    """7 row masks + 7 column masks (at output positions) over the flat,
    zero-padded row-major spatial axis.  Tap (kh, kw) is valid at output
    (y, x) iff 0 <= y+kh-3 < H and 0 <= x+kw-3 < W; everything else
    (including circular wraps of the flat rolls and the pad region) is zeroed
    by the product of the two separable masks."""
    f = jnp.arange(HWp, dtype=jnp.int32)
    y = f // W
    x = f % W
    rows = [((y + (kh - 3) >= 0) & (y + (kh - 3) < H)) for kh in range(7)]
    cols = [((x + (kw - 3) >= 0) & (x + (kw - 3) < W)) for kw in range(7)]
    return jnp.stack(rows + cols, axis=0).astype(jnp.float32)       # (14, HWp)


def _build_tap_weights(conv_weight, C, Bt):
    """(49, 2*Bt, 1) per-tap per-sublane weights; the mean-channel weights are
    pre-scaled by 1/C so the kernel only needs a channel SUM."""
    w = conv_weight.reshape(2, 49).astype(jnp.float32)
    w = w.at[1].multiply(1.0 / C)                                    # fold 1/C
    per_tap = jnp.transpose(w)                                       # (49, 2)
    return jnp.repeat(per_tap, Bt, axis=1)[:, :, None]               # (49, 2*Bt, 1)


def _vmem_capacity_bytes():
    # Generation-aware (v5e/v6e: 128 MiB, v7x: 64 MiB per TensorCore).
    try:
        return int(pltpu.get_tpu_info().vmem_capacity_bytes)
    except Exception:
        return 64 * 1024 * 1024          # conservative (v7x-sized) fallback


def _round_up(v, m):
    return (v + m - 1) // m * m


def _vmem_estimate_bytes(Bt, C, HWp, x_itemsize, o_itemsize):
    x_blk = Bt * _round_up(C, 8) * HWp * x_itemsize     # (Bt, C, HWp) input block
    o_blk = Bt * 8 * HWp * o_itemsize                   # (Bt, 1, HWp) output block
    masks = _round_up(14, 8) * HWp * 4                  # (14, HWp) boundary masks
    wvs = 49 * _round_up(2 * Bt, 8) * 128 * 4           # (49, 2*Bt, 1) tap weights
    work = 20 * Bt * HWp * 4                            # f32 working set (p/acc/band/cur/...)
    return 2 * (x_blk + o_blk + masks + wvs) + work     # x2: double-buffered blocks


def _pick_batch_tile(N, C, HWp, x_itemsize, o_itemsize, budget_bytes):
    """Largest Bt dividing N that fits the VMEM budget and keeps >= 2 grid
    steps when N >= 2 (so both v7x TensorCores get work)."""
    best = 1
    for bt in range(1, N + 1):
        if N % bt:
            continue
        if N >= 2 and N // bt < 2:
            continue
        if _vmem_estimate_bytes(bt, C, HWp, x_itemsize, o_itemsize) <= budget_bytes:
            best = bt
    return best


def spatial_attention(x, conv_weight, *, batch_tile=None, vmem_limit_bytes=None):
    """SpatialAttention forward. x: (N, C, H, W); conv_weight: (1, 2, 7, 7)."""
    N, C, H, W = x.shape
    HW = H * W
    HWp = _round_up(HW, 128)             # lane-dense flat spatial axis (unmasked vst)
    x_isz = jnp.dtype(x.dtype).itemsize

    cap = _vmem_capacity_bytes()
    if batch_tile is None:
        batch_tile = _pick_batch_tile(N, C, HWp, x_isz, x_isz, cap // 4)
    Bt = batch_tile
    assert N % Bt == 0, (N, Bt)
    # TODO(synk): if even a single (1, C, HWp) block exceeds the budget (huge
    # C*H*W), add a trailing channel-chunk grid axis ('arbitrary') with running
    # max / running sum accumulators instead of growing VMEM further.
    # TODO(synk): when N == 1 on v7x, a second 'parallel' grid axis over row
    # bands (3-row halo) would keep both TensorCores busy.
    # TODO(synk): for large maps with W a multiple of 128, a 2D (2*Bt, H, Wp)
    # layout (row offsets via pl.ds on H, only column offsets as lane rolls /
    # banded MXU matmuls) halves the cross-lane work on v6e/v7x.
    est = _vmem_estimate_bytes(Bt, C, HWp, x_isz, x_isz)
    if vmem_limit_bytes is None:
        vmem_limit_bytes = min(max(32 * 1024 * 1024, 2 * est), cap * 3 // 4)
    vmem_limit_bytes = int(max(vmem_limit_bytes, est + (4 << 20)))

    x_flat = x.reshape(N, C, HW)                           # XLA-level layout plumbing
    if HWp != HW:
        x_flat = jnp.pad(x_flat, ((0, 0), (0, 0), (0, HWp - HW)))
    masks = _build_boundary_masks(H, W, HWp)               # (14, HWp)      f32
    wv = _build_tap_weights(conv_weight, C, Bt)            # (49, 2*Bt, 1)  f32

    kernel = functools.partial(_spatial_attention_kernel, Bt=Bt, C=C, W=W, HWp=HWp)
    out = pl.pallas_call(
        kernel,
        out_shape=jax.ShapeDtypeStruct((N, 1, HWp), x.dtype),
        grid=(N // Bt,),
        in_specs=[
            pl.BlockSpec((Bt, C, HWp), lambda n: (n, 0, 0)),
            pl.BlockSpec((14, HWp), lambda n: (0, 0)),
            pl.BlockSpec((49, 2 * Bt, 1), lambda n: (0, 0, 0)),
        ],
        out_specs=pl.BlockSpec((Bt, 1, HWp), lambda n: (n, 0, 0)),
        compiler_params=pltpu.CompilerParams(
            dimension_semantics=("parallel",),
            vmem_limit_bytes=vmem_limit_bytes),
    )(x_flat, masks, wv)
    return out[..., :HW].reshape(N, 1, H, W)


# ---------------------------------------------------------------------------
# Remaining FeatureEnhancementModule pieces (XLA level)
# ---------------------------------------------------------------------------
# TODO(synk): the bilinear upsample and the dense 3x3/5x5/7x7 convolutions are
# left to XLA (lax.conv) rather than hand-written Pallas kernels; only the
# SpatialAttention block is kernelized here.
def _upsample_bilinear_x2_align_corners(x):
    """F.interpolate(x, scale_factor=2, mode='bilinear', align_corners=True)."""
    n, c, h, w = x.shape
    h2, w2 = 2 * h, 2 * w

    def coords(out_size, in_size):
        if out_size == 1 or in_size == 1:
            z = jnp.zeros((out_size,), jnp.float32)
            return z, z.astype(jnp.int32), z.astype(jnp.int32)
        src = jnp.arange(out_size, dtype=jnp.float32) * (in_size - 1) / (out_size - 1)
        lo = jnp.clip(jnp.floor(src), 0, in_size - 1).astype(jnp.int32)
        hi = jnp.minimum(lo + 1, in_size - 1)
        return src - lo.astype(jnp.float32), lo, hi

    fy, y0, y1 = coords(h2, h)
    fx, x0, x1 = coords(w2, w)
    rows = (x[:, :, y0, :] * (1.0 - fy)[None, None, :, None]
            + x[:, :, y1, :] * fy[None, None, :, None])
    out = (rows[:, :, :, x0] * (1.0 - fx)[None, None, None, :]
           + rows[:, :, :, x1] * fx[None, None, None, :])
    return out


def _conv2d_nchw(x, w, padding, bias=None):
    y = lax.conv_general_dilated(
        x, w, window_strides=(1, 1),
        padding=((padding, padding), (padding, padding)),
        dimension_numbers=("NCHW", "OIHW", "NCHW"))
    if bias is not None:
        y = y + bias[None, :, None, None]
    return y


def apply_freq_filter_per_channel(feature_map, filter_type="high_pass", cutoff_freq=0.7):
    # TODO(synk): FFT has no Pallas/Mosaic primitive; the frequency filter runs
    # as XLA-level jnp.fft ops (faithful port of the PyTorch function,
    # including its 'low_pass' mask-of-ones behaviour).
    f_transform = jnp.fft.fft2(feature_map)
    f_shift = jnp.fft.fftshift(f_transform)
    _, _, rows, cols = feature_map.shape
    crow, ccol = rows // 2, cols // 2
    r = int(cutoff_freq * crow)
    c = int(cutoff_freq * ccol)
    mask = jnp.zeros_like(feature_map)
    if filter_type == "high_pass":
        mask = mask.at[:, :, crow - r:crow + r, ccol - c:ccol + c].set(1.0)
    elif filter_type == "low_pass":
        mask = mask.at[:, :, crow - r:crow + r, ccol - c:ccol + c].set(0.0)
        mask = 1.0 - mask
    f_filtered = f_shift * mask
    f_ishift = jnp.fft.ifftshift(f_filtered)
    filtered = jnp.fft.ifft2(f_ishift)
    return jnp.abs(filtered)


def _pre_attention(params, x1, x2):
    """Everything before SpatialAttention (shared by kernel & reference paths)."""
    x1u = _upsample_bilinear_x2_align_corners(x1)
    x1c = jax.nn.relu(_conv2d_nchw(x1u, params["conv_w"], 1, bias=params["conv_b"]))
    combined = x1c + x2
    multi_scale = (_conv2d_nchw(combined, params["w3"], 1)
                   + _conv2d_nchw(combined, params["w5"], 2)
                   + _conv2d_nchw(combined, params["w7"], 3)).astype(jnp.float32)
    return apply_freq_filter_per_channel(multi_scale, "low_pass", 0.7)


def feature_enhancement_forward(params, x1, x2):
    """FeatureEnhancementModule.forward(x1, x2) with the Pallas SpatialAttention."""
    return spatial_attention(_pre_attention(params, x1, x2), params["sa_w"])


# ---------------------------------------------------------------------------
# Pure-JAX references
# ---------------------------------------------------------------------------
def _spatial_attention_reference(x, conv_weight):
    max_out = jnp.max(x, axis=1, keepdims=True)
    avg_out = jnp.mean(x, axis=1, keepdims=True)
    xc = jnp.concatenate([max_out, avg_out], axis=1)
    y = lax.conv_general_dilated(
        xc, conv_weight, window_strides=(1, 1), padding=((3, 3), (3, 3)),
        dimension_numbers=("NCHW", "OIHW", "NCHW"),
        precision=lax.Precision.HIGHEST)
    return jax.nn.sigmoid(y) * y


def feature_enhancement_reference(params, x1, x2):
    return _spatial_attention_reference(_pre_attention(params, x1, x2), params["sa_w"])


def _init_params(key, channels, out_planes):
    """Deterministic kaiming-uniform-like init (mirrors nn.Conv2d defaults)."""
    ks = jax.random.split(key, 6)

    def uniform(k, shape, fan_in):
        bound = 1.0 / (fan_in ** 0.5)
        return jax.random.uniform(k, shape, jnp.float32, minval=-bound, maxval=bound)

    return {
        "conv_w": uniform(ks[0], (out_planes, channels, 3, 3), channels * 9),
        "conv_b": uniform(ks[1], (out_planes,), channels * 9),
        "w3": uniform(ks[2], (out_planes, out_planes, 3, 3), out_planes * 9),
        "w5": uniform(ks[3], (out_planes, out_planes, 5, 5), out_planes * 25),
        "w7": uniform(ks[4], (out_planes, out_planes, 7, 7), out_planes * 49),
        "sa_w": uniform(ks[5], (1, 2, 7, 7), 2 * 49),
    }


if __name__ == "__main__":
    key = jax.random.PRNGKey(0)
    k_x1, k_x2, k_p, k_a, k_w = jax.random.split(key, 5)

    N, channels, out_planes, H, W = 2, 4, 4, 16, 16
    x1 = jax.random.normal(k_x1, (N, channels, H // 2, W // 2), dtype=jnp.float32)
    x2 = jax.random.normal(k_x2, (N, out_planes, H, W), dtype=jnp.float32)
    params = _init_params(k_p, channels, out_planes)

    # Full module forward with the Pallas SpatialAttention kernel.
    out = feature_enhancement_forward(params, x1, x2)
    jax.block_until_ready(out)
    assert out.shape == (N, 1, H, W), out.shape

    # Direct check of the Pallas kernel against a lax.conv reference.
    filtered = _pre_attention(params, x1, x2)
    got = spatial_attention(filtered, params["sa_w"])
    want = _spatial_attention_reference(filtered, params["sa_w"])
    err = float(jnp.max(jnp.abs(got - want)))
    assert jnp.allclose(got, want, rtol=1e-4, atol=1e-5), err

    # End-to-end check (the XLA prefix is shared; only the attention differs).
    ref = feature_enhancement_reference(params, x1, x2)
    err_full = float(jnp.max(jnp.abs(out - ref)))
    assert jnp.allclose(out, ref, rtol=1e-4, atol=1e-5), err_full

    # Extra check: non-128-multiple H*W (exercises lane padding), odd C, Bt=2.
    xa = jax.random.normal(k_a, (4, 3, 10, 10), dtype=jnp.float32)
    wa = jax.random.uniform(k_w, (1, 2, 7, 7), jnp.float32, minval=-0.1, maxval=0.1)
    got2 = spatial_attention(xa, wa)
    want2 = _spatial_attention_reference(xa, wa)
    err2 = float(jnp.max(jnp.abs(got2 - want2)))
    assert jnp.allclose(got2, want2, rtol=1e-4, atol=1e-5), err2

    print("KERNEL_OK")
</pallas_src>

<mosaic_0001>
module attributes {stable_mosaic.version = 11 : i64} {
  func.func @_spatial_attention_kernel(%arg0: i32, %arg1: memref<1x4x256xf32, #tpu.memory_space<vmem>>, %arg2: memref<14x256xf32, #tpu.memory_space<vmem>>, %arg3: memref<49x2x1xf32, #tpu.memory_space<vmem>>, %arg4: memref<1x1x256xf32, #tpu.memory_space<vmem>>) attributes {dimension_semantics = [#tpu.dimension_semantics<parallel>], iteration_bounds = array<i64: 2>, scalar_prefetch = 0 : i64, scratch_operands = 0 : i64, tpu.core_type = #tpu.core_type<tc>, window_params = [{transform_indices = @transform_0, window_bounds = array<i64: 1, 4, 256>}, {pipeline_mode = #tpu.pipeline_mode<synchronous>, transform_indices = @transform_1, window_bounds = array<i64: 14, 256>}, {pipeline_mode = #tpu.pipeline_mode<synchronous>, transform_indices = @transform_2, window_bounds = array<i64: 49, 2, 1>}, {transform_indices = @transform_3, window_bounds = array<i64: 1, 1, 256>}]} {
    %c0 = arith.constant 0 : index
    %c0_0 = arith.constant 0 : index
    %c0_1 = arith.constant 0 : index
    %0 = vector.load %arg1[%c0, %c0_0, %c0_1] : memref<1x4x256xf32, #tpu.memory_space<vmem>>, vector<1x1x256xf32>
    %1 = vector.shape_cast %0 : vector<1x1x256xf32> to vector<1x256xf32>
    %c0_2 = arith.constant 0 : index
    %c1 = arith.constant 1 : index
    %c0_3 = arith.constant 0 : index
    %2 = vector.load %arg1[%c0_2, %c1, %c0_3] : memref<1x4x256xf32, #tpu.memory_space<vmem>>, vector<1x1x256xf32>
    %3 = vector.shape_cast %2 : vector<1x1x256xf32> to vector<1x256xf32>
    %4 = arith.maximumf %1, %3 : vector<1x256xf32>
    %5 = arith.addf %1, %3 : vector<1x256xf32>
    %c0_4 = arith.constant 0 : index
    %c2 = arith.constant 2 : index
    %c0_5 = arith.constant 0 : index
    %6 = vector.load %arg1[%c0_4, %c2, %c0_5] : memref<1x4x256xf32, #tpu.memory_space<vmem>>, vector<1x1x256xf32>
    %7 = vector.shape_cast %6 : vector<1x1x256xf32> to vector<1x256xf32>
    %8 = arith.maximumf %4, %7 : vector<1x256xf32>
    %9 = arith.addf %5, %7 : vector<1x256xf32>
    %c0_6 = arith.constant 0 : index
    %c3 = arith.constant 3 : index
    %c0_7 = arith.constant 0 : index
    %10 = vector.load %arg1[%c0_6, %c3, %c0_7] : memref<1x4x256xf32, #tpu.memory_space<vmem>>, vector<1x1x256xf32>
    %11 = vector.shape_cast %10 : vector<1x1x256xf32> to vector<1x256xf32>
    %12 = arith.maximumf %8, %11 : vector<1x256xf32>
    %13 = arith.addf %9, %11 : vector<1x256xf32>
    %14 = tpu.concatenate %12, %13 in 0 : vector<1x256xf32>, vector<1x256xf32> -> vector<2x256xf32>
    %cst = arith.constant 0.000000e+00 : f32
    %15 = vector.broadcast %cst : f32 to vector<2x256xf32>
    %c48_i32 = arith.constant 48 : i32
    %16 = tpu.dynamic_rotate %14 by %c48_i32 dim 1 : vector<2x256xf32>, i32 -> vector<2x256xf32>
    %c0_8 = arith.constant 0 : index
    %c0_9 = arith.constant 0 : index
    %17 = vector.load %arg2[%c0_8, %c0_9] : memref<14x256xf32, #tpu.memory_space<vmem>>, vector<1x256xf32>
    %18 = vector.broadcast %17 : vector<1x256xf32> to vector<2x256xf32>
    %19 = arith.mulf %16, %18 : vector<2x256xf32>
    %c3_i32 = arith.constant 3 : i32
    %20 = tpu.dynamic_rotate %19 by %c3_i32 dim 1 : vector<2x256xf32>, i32 -> vector<2x256xf32>
    %c7 = arith.constant 7 : index
    %c0_10 = arith.constant 0 : index
    %21 = vector.load %arg2[%c7, %c0_10] : memref<14x256xf32, #tpu.memory_space<vmem>>, vector<1x256xf32>
    %c0_11 = arith.constant 0 : index
    %c0_12 = arith.constant 0 : index
    %c0_13 = arith.constant 0 : index
    %22 = vector.load %arg3[%c0_11, %c0_12, %c0_13] : memref<49x2x1xf32, #tpu.memory_space<vmem>>, vector<1x2x1xf32>
    %23 = vector.shape_cast %22 : vector<1x2x1xf32> to vector<2x1xf32>
    %24 = vector.broadcast %23 : vector<2x1xf32> to vector<2x256xf32>
    %25 = arith.mulf %20, %24 : vector<2x256xf32>
    %26 = vector.broadcast %21 : vector<1x256xf32> to vector<2x256xf32>
    %27 = arith.mulf %25, %26 : vector<2x256xf32>
    %28 = arith.addf %15, %27 : vector<2x256xf32>
    %c255_i32 = arith.constant 255 : i32
    %29 = tpu.dynamic_rotate %20 by %c255_i32 dim 1 : vector<2x256xf32>, i32 -> vector<2x256xf32>
    %c8 = arith.constant 8 : index
    %c0_14 = arith.constant 0 : index
    %30 = vector.load %arg2[%c8, %c0_14] : memref<14x256xf32, #tpu.memory_space<vmem>>, vector<1x256xf32>
    %c1_15 = arith.constant 1 : index
    %c0_16 = arith.constant 0 : index
    %c0_17 = arith.constant 0 : index
    %31 = vector.load %arg3[%c1_15, %c0_16, %c0_17] : memref<49x2x1xf32, #tpu.memory_space<vmem>>, vector<1x2x1xf32>
    %32 = vector.shape_cast %31 : vector<1x2x1xf32> to vector<2x1xf32>
    %33 = vector.broadcast %32 : vector<2x1xf32> to vector<2x256xf32>
    %34 = arith.mulf %29, %33 : vector<2x256xf32>
    %35 = vector.broadcast %30 : vector<1x256xf32> to vector<2x256xf32>
    %36 = arith.mulf %34, %35 : vector<2x256xf32>
    %37 = arith.addf %28, %36 : vector<2x256xf32>
    %c255_i32_18 = arith.constant 255 : i32
    %38 = tpu.dynamic_rotate %29 by %c255_i32_18 dim 1 : vector<2x256xf32>, i32 -> vector<2x256xf32>
    %c9 = arith.constant 9 : index
    %c0_19 = arith.constant 0 : index
    %39 = vector.load %arg2[%c9, %c0_19] : memref<14x256xf32, #tpu.memory_space<vmem>>, vector<1x256xf32>
    %c2_20 = arith.constant 2 : index
    %c0_21 = arith.constant 0 : index
    %c0_22 = arith.constant 0 : index
    %40 = vector.load %arg3[%c2_20, %c0_21, %c0_22] : memref<49x2x1xf32, #tpu.memory_space<vmem>>, vector<1x2x1xf32>
    %41 = vector.shape_cast %40 : vector<1x2x1xf32> to vector<2x1xf32>
    %42 = vector.broadcast %41 : vector<2x1xf32> to vector<2x256xf32>
    %43 = arith.mulf %38, %42 : vector<2x256xf32>
    %44 = vector.broadcast %39 : vector<1x256xf32> to vector<2x256xf32>
    %45 = arith.mulf %43, %44 : vector<2x256xf32>
    %46 = arith.addf %37, %45 : vector<2x256xf32>
    %c255_i32_23 = arith.constant 255 : i32
    %47 = tpu.dynamic_rotate %38 by %c255_i32_23 dim 1 : vector<2x256xf32>, i32 -> vector<2x256xf32>
    %c10 = arith.constant 10 : index
    %c0_24 = arith.constant 0 : index
    %48 = vector.load %arg2[%c10, %c0_24] : memref<14x256xf32, #tpu.memory_space<vmem>>, vector<1x256xf32>
    %c3_25 = arith.constant 3 : index
    %c0_26 = arith.constant 0 : index
    %c0_27 = arith.constant 0 : index
    %49 = vector.load %arg3[%c3_25, %c0_26, %c0_27] : memref<49x2x1xf32, #tpu.memory_space<vmem>>, vector<1x2x1xf32>
    %50 = vector.shape_cast %49 : vector<1x2x1xf32> to vector<2x1xf32>
    %51 = vector.broadcast %50 : vector<2x1xf32> to vector<2x256xf32>
    %52 = arith.mulf %47, %51 : vector<2x256xf32>
    %53 = vector.broadcast %48 : vector<1x256xf32> to vector<2x256xf32>
    %54 = arith.mulf %52, %53 : vector<2x256xf32>
    %55 = arith.addf %46, %54 : vector<2x256xf32>
    %c255_i32_28 = arith.constant 255 : i32
    %56 = tpu.dynamic_rotate %47 by %c255_i32_28 dim 1 : vector<2x256xf32>, i32 -> vector<2x256xf32>
    %c11 = arith.constant 11 : index
    %c0_29 = arith.constant 0 : index
    %57 = vector.load %arg2[%c11, %c0_29] : memref<14x256xf32, #tpu.memory_space<vmem>>, vector<1x256xf32>
    %c4 = arith.constant 4 : index
    %c0_30 = arith.constant 0 : index
    %c0_31 = arith.constant 0 : index
    %58 = vector.load %arg3[%c4, %c0_30, %c0_31] : memref<49x2x1xf32, #tpu.memory_space<vmem>>, vector<1x2x1xf32>
    %59 = vector.shape_cast %58 : vector<1x2x1xf32> to vector<2x1xf32>
    %60 = vector.broadcast %59 : vector<2x1xf32> to vector<2x256xf32>
    %61 = arith.mulf %56, %60 : vector<2x256xf32>
    %62 = vector.broadcast %57 : vector<1x256xf32> to vector<2x256xf32>
    %63 = arith.mulf %61, %62 : vector<2x256xf32>
    %64 = arith.addf %55, %63 : vector<2x256xf32>
    %c255_i32_32 = arith.constant 255 : i32
    %65 = tpu.dynamic_rotate %56 by %c255_i32_32 dim 1 : vector<2x256xf32>, i32 -> vector<2x256xf32>
    %c12 = arith.constant 12 : index
    %c0_33 = arith.constant 0 : index
    %66 = vector.load %arg2[%c12, %c0_33] : memref<14x256xf32, #tpu.memory_space<vmem>>, vector<1x256xf32>
    %c5 = arith.constant 5 : index
    %c0_34 = arith.constant 0 : index
    %c0_35 = arith.constant 0 : index
    %67 = vector.load %arg3[%c5, %c0_34, %c0_35] : memref<49x2x1xf32, #tpu.memory_space<vmem>>, vector<1x2x1xf32>
    %68 = vector.shape_cast %67 : vector<1x2x1xf32> to vector<2x1xf32>
    %69 = vector.broadcast %68 : vector<2x1xf32> to vector<2x256xf32>
    %70 = arith.mulf %65, %69 : vector<2x256xf32>
    %71 = vector.broadcast %66 : vector<1x256xf32> to vector<2x256xf32>
    %72 = arith.mulf %70, %71 : vector<2x256xf32>
    %73 = arith.addf %64, %72 : vector<2x256xf32>
    %c255_i32_36 = arith.constant 255 : i32
    %74 = tpu.dynamic_rotate %65 by %c255_i32_36 dim 1 : vector<2x256xf32>, i32 -> vector<2x256xf32>
    %c13 = arith.constant 13 : index
    %c0_37 = arith.constant 0 : index
    %75 = vector.load %arg2[%c13, %c0_37] : memref<14x256xf32, #tpu.memory_space<vmem>>, vector<1x256xf32>
    %c6 = arith.constant 6 : index
    %c0_38 = arith.constant 0 : index
    %c0_39 = arith.constant 0 : index
    %76 = vector.load %arg3[%c6, %c0_38, %c0_39] : memref<49x2x1xf32, #tpu.memory_space<vmem>>, vector<1x2x1xf32>
    %77 = vector.shape_cast %76 : vector<1x2x1xf32> to vector<2x1xf32>
    %78 = vector.broadcast %77 : vector<2x1xf32> to vector<2x256xf32>
    %79 = arith.mulf %74, %78 : vector<2x256xf32>
    %80 = vector.broadcast %75 : vector<1x256xf32> to vector<2x256xf32>
    %81 = arith.mulf %79, %80 : vector<2x256xf32>
    %82 = arith.addf %73, %81 : vector<2x256xf32>
    %c240_i32 = arith.constant 240 : i32
    %83 = tpu.dynamic_rotate %16 by %c240_i32 dim 1 : vector<2x256xf32>, i32 -> vector<2x256xf32>
    %c1_40 = arith.constant 1 : index
    %c0_41 = arith.constant 0 : index
    %84 = vector.load %arg2[%c1_40, %c0_41] : memref<14x256xf32, #tpu.memory_space<vmem>>, vector<1x256xf32>
    %85 = vector.broadcast %84 : vector<1x256xf32> to vector<2x256xf32>
    %86 = arith.mulf %83, %85 : vector<2x256xf32>
    %c3_i32_42 = arith.constant 3 : i32
    %87 = tpu.dynamic_rotate %86 by %c3_i32_42 dim 1 : vector<2x256xf32>, i32 -> vector<2x256xf32>
    %c7_43 = arith.constant 7 : index
    %c0_44 = arith.constant 0 : index
    %88 = vector.load %arg2[%c7_43, %c0_44] : memref<14x256xf32, #tpu.memory_space<vmem>>, vector<1x256xf32>
    %c7_45 = arith.constant 7 : index
    %c0_46 = arith.constant 0 : index
    %c0_47 = arith.constant 0 : index
    %89 = vector.load %arg3[%c7_45, %c0_46, %c0_47] : memref<49x2x1xf32, #tpu.memory_space<vmem>>, vector<1x2x1xf32>
    %90 = vector.shape_cast %89 : vector<1x2x1xf32> to vector<2x1xf32>
    %91 = vector.broadcast %90 : vector<2x1xf32> to vector<2x256xf32>
    %92 = arith.mulf %87, %91 : vector<2x256xf32>
    %93 = vector.broadcast %88 : vector<1x256xf32> to vector<2x256xf32>
    %94 = arith.mulf %92, %93 : vector<2x256xf32>
    %95 = arith.addf %82, %94 : vector<2x256xf32>
    %c255_i32_48 = arith.constant 255 : i32
    %96 = tpu.dynamic_rotate %87 by %c255_i32_48 dim 1 : vector<2x256xf32>, i32 -> vector<2x256xf32>
    %c8_49 = arith.constant 8 : index
    %c0_50 = arith.constant 0 : index
    %97 = vector.load %arg2[%c8_49, %c0_50] : memref<14x256xf32, #tpu.memory_space<vmem>>, vector<1x256xf32>
    %c8_51 = arith.constant 8 : index
    %c0_52 = arith.constant 0 : index
    %c0_53 = arith.constant 0 : index
    %98 = vector.load %arg3[%c8_51, %c0_52, %c0_53] : memref<49x2x1xf32, #tpu.memory_space<vmem>>, vector<1x2x1xf32>
    %99 = vector.shape_cast %98 : vector<1x2x1xf32> to vector<2x1xf32>
    %100 = vector.broadcast %99 : vector<2x1xf32> to vector<2x256xf32>
    %101 = arith.mulf %96, %100 : vector<2x256xf32>
    %102 = vector.broadcast %97 : vector<1x256xf32> to vector<2x256xf32>
    %103 = arith.mulf %101, %102 : vector<2x256xf32>
    %104 = arith.addf %95, %103 : vector<2x256xf32>
    %c255_i32_54 = arith.constant 255 : i32
    %105 = tpu.dynamic_rotate %96 by %c255_i32_54 dim 1 : vector<2x256xf32>, i32 -> vector<2x256xf32>
    %c9_55 = arith.constant 9 : index
    %c0_56 = arith.constant 0 : index
    %106 = vector.load %arg2[%c9_55, %c0_56] : memref<14x256xf32, #tpu.memory_space<vmem>>, vector<1x256xf32>
    %c9_57 = arith.constant 9 : index
    %c0_58 = arith.constant 0 : index
    %c0_59 = arith.constant 0 : index
    %107 = vector.load %arg3[%c9_57, %c0_58, %c0_59] : memref<49x2x1xf32, #tpu.memory_space<vmem>>, vector<1x2x1xf32>
    %108 = vector.shape_cast %107 : vector<1x2x1xf32> to vector<2x1xf32>
    %109 = vector.broadcast %108 : vector<2x1xf32> to vector<2x256xf32>
    %110 = arith.mulf %105, %109 : vector<2x256xf32>
    %111 = vector.broadcast %106 : vector<1x256xf32> to vector<2x256xf32>
    %112 = arith.mulf %110, %111 : vector<2x256xf32>
    %113 = arith.addf %104, %112 : vector<2x256xf32>
    %c255_i32_60 = arith.constant 255 : i32
    %114 = tpu.dynamic_rotate %105 by %c255_i32_60 dim 1 : vector<2x256xf32>, i32 -> vector<2x256xf32>
    %c10_61 = arith.constant 10 : index
    %c0_62 = arith.constant 0 : index
    %115 = vector.load %arg2[%c10_61, %c0_62] : memref<14x256xf32, #tpu.memory_space<vmem>>, vector<1x256xf32>
    %c10_63 = arith.constant 10 : index
    %c0_64 = arith.constant 0 : index
    %c0_65 = arith.constant 0 : index
    %116 = vector.load %arg3[%c10_63, %c0_64, %c0_65] : memref<49x2x1xf32, #tpu.memory_space<vmem>>, vector<1x2x1xf32>
    %117 = vector.shape_cast %116 : vector<1x2x1xf32> to vector<2x1xf32>
    %118 = vector.broadcast %117 : vector<2x1xf32> to vector<2x256xf32>
    %119 = arith.mulf %114, %118 : vector<2x256xf32>
    %120 = vector.broadcast %115 : vector<1x256xf32> to vector<2x256xf32>
    %121 = arith.mulf %119, %120 : vector<2x256xf32>
    %122 = arith.addf %113, %121 : vector<2x256xf32>
    %c255_i32_66 = arith.constant 255 : i32
    %123 = tpu.dynamic_rotate %114 by %c255_i32_66 dim 1 : vector<2x256xf32>, i32 -> vector<2x256xf32>
    %c11_67 = arith.constant 11 : index
    %c0_68 = arith.constant 0 : index
    %124 = vector.load %arg2[%c11_67, %c0_68] : memref<14x256xf32, #tpu.memory_space<vmem>>, vector<1x256xf32>
    %c11_69 = arith.constant 11 : index
    %c0_70 = arith.constant 0 : index
    %c0_71 = arith.constant 0 : index
    %125 = vector.load %arg3[%c11_69, %c0_70, %c0_71] : memref<49x2x1xf32, #tpu.memory_space<vmem>>, vector<1x2x1xf32>
    %126 = vector.shape_cast %125 : vector<1x2x1xf32> to vector<2x1xf32>
    %127 = vector.broadcast %126 : vector<2x1xf32> to vector<2x256xf32>
    %128 = arith.mulf %123, %127 : vector<2x256xf32>
    %129 = vector.broadcast %124 : vector<1x256xf32> to vector<2x256xf32>
    %130 = arith.mulf %128, %129 : vector<2x256xf32>
    %131 = arith.addf %122, %130 : vector<2x256xf32>
    %c255_i32_72 = arith.constant 255 : i32
    %132 = tpu.dynamic_rotate %123 by %c255_i32_72 dim 1 : vector<2x256xf32>, i32 -> vector<2x256xf32>
    %c12_73 = arith.constant 12 : index
    %c0_74 = arith.constant 0 : index
    %133 = vector.load %arg2[%c12_73, %c0_74] : memref<14x256xf32, #tpu.memory_space<vmem>>, vector<1x256xf32>
    %c12_75 = arith.constant 12 : index
    %c0_76 = arith.constant 0 : index
    %c0_77 = arith.constant 0 : index
    %134 = vector.load %arg3[%c12_75, %c0_76, %c0_77] : memref<49x2x1xf32, #tpu.memory_space<vmem>>, vector<1x2x1xf32>
    %135 = vector.shape_cast %134 : vector<1x2x1xf32> to vector<2x1xf32>
    %136 = vector.broadcast %135 : vector<2x1xf32> to vector<2x256xf32>
    %137 = arith.mulf %132, %136 : vector<2x256xf32>
    %138 = vector.broadcast %133 : vector<1x256xf32> to vector<2x256xf32>
    %139 = arith.mulf %137, %138 : vector<2x256xf32>
    %140 = arith.addf %131, %139 : vector<2x256xf32>
    %c255_i32_78 = arith.constant 255 : i32
    %141 = tpu.dynamic_rotate %132 by %c255_i32_78 dim 1 : vector<2x256xf32>, i32 -> vector<2x256xf32>
    %c13_79 = arith.constant 13 : index
    %c0_80 = arith.constant 0 : index
    %142 = vector.load %arg2[%c13_79, %c0_80] : memref<14x256xf32, #tpu.memory_space<vmem>>, vector<1x256xf32>
    %c13_81 = arith.constant 13 : index
    %c0_82 = arith.constant 0 : index
    %c0_83 = arith.constant 0 : index
    %143 = vector.load %arg3[%c13_81, %c0_82, %c0_83] : memref<49x2x1xf32, #tpu.memory_space<vmem>>, vector<1x2x1xf32>
    %144 = vector.shape_cast %143 : vector<1x2x1xf32> to vector<2x1xf32>
    %145 = vector.broadcast %144 : vector<2x1xf32> to vector<2x256xf32>
    %146 = arith.mulf %141, %145 : vector<2x256xf32>
    %147 = vector.broadcast %142 : vector<1x256xf32> to vector<2x256xf32>
    %148 = arith.mulf %146, %147 : vector<2x256xf32>
    %149 = arith.addf %140, %148 : vector<2x256xf32>
    %c240_i32_84 = arith.constant 240 : i32
    %150 = tpu.dynamic_rotate %83 by %c240_i32_84 dim 1 : vector<2x256xf32>, i32 -> vector<2x256xf32>
    %c2_85 = arith.constant 2 : index
    %c0_86 = arith.constant 0 : index
    %151 = vector.load %arg2[%c2_85, %c0_86] : memref<14x256xf32, #tpu.memory_space<vmem>>, vector<1x256xf32>
    %152 = vector.broadcast %151 : vector<1x256xf32> to vector<2x256xf32>
    %153 = arith.mulf %150, %152 : vector<2x256xf32>
    %c3_i32_87 = arith.constant 3 : i32
    %154 = tpu.dynamic_rotate %153 by %c3_i32_87 dim 1 : vector<2x256xf32>, i32 -> vector<2x256xf32>
    %c7_88 = arith.constant 7 : index
    %c0_89 = arith.constant 0 : index
    %155 = vector.load %arg2[%c7_88, %c0_89] : memref<14x256xf32, #tpu.memory_space<vmem>>, vector<1x256xf32>
    %c14 = arith.constant 14 : index
    %c0_90 = arith.constant 0 : index
    %c0_91 = arith.constant 0 : index
    %156 = vector.load %arg3[%c14, %c0_90, %c0_91] : memref<49x2x1xf32, #tpu.memory_space<vmem>>, vector<1x2x1xf32>
    %157 = vector.shape_cast %156 : vector<1x2x1xf32> to vector<2x1xf32>
    %158 = vector.broadcast %157 : vector<2x1xf32> to vector<2x256xf32>
    %159 = arith.mulf %154, %158 : vector<2x256xf32>
    %160 = vector.broadcast %155 : vector<1x256xf32> to vector<2x256xf32>
    %161 = arith.mulf %159, %160 : vector<2x256xf32>
    %162 = arith.addf %149, %161 : vector<2x256xf32>
    %c255_i32_92 = arith.constant 255 : i32
    %163 = tpu.dynamic_rotate %154 by %c255_i32_92 dim 1 : vector<2x256xf32>, i32 -> vector<2x256xf32>
    %c8_93 = arith.constant 8 : index
    %c0_94 = arith.constant 0 : index
    %164 = vector.load %arg2[%c8_93, %c0_94] : memref<14x256xf32, #tpu.memory_space<vmem>>, vector<1x256xf32>
    %c15 = arith.constant 15 : index
    %c0_95 = arith.constant 0 : index
    %c0_96 = arith.constant 0 : index
    %165 = vector.load %arg3[%c15, %c0_95, %c0_96] : memref<49x2x1xf32, #tpu.memory_space<vmem>>, vector<1x2x1xf32>
    %166 = vector.shape_cast %165 : vector<1x2x1xf32> to vector<2x1xf32>
    %167 = vector.broadcast %166 : vector<2x1xf32> to vector<2x256xf32>
    %168 = arith.mulf %163, %167 : vector<2x256xf32>
    %169 = vector.broadcast %164 : vector<1x256xf32> to vector<2x256xf32>
    %170 = arith.mulf %168, %169 : vector<2x256xf32>
    %171 = arith.addf %162, %170 : vector<2x256xf32>
    %c255_i32_97 = arith.constant 255 : i32
    %172 = tpu.dynamic_rotate %163 by %c255_i32_97 dim 1 : vector<2x256xf32>, i32 -> vector<2x256xf32>
    %c9_98 = arith.constant 9 : index
    %c0_99 = arith.constant 0 : index
    %173 = vector.load %arg2[%c9_98, %c0_99] : memref<14x256xf32, #tpu.memory_space<vmem>>, vector<1x256xf32>
    %c16 = arith.constant 16 : index
    %c0_100 = arith.constant 0 : index
    %c0_101 = arith.constant 0 : index
    %174 = vector.load %arg3[%c16, %c0_100, %c0_101] : memref<49x2x1xf32, #tpu.memory_space<vmem>>, vector<1x2x1xf32>
    %175 = vector.shape_cast %174 : vector<1x2x1xf32> to vector<2x1xf32>
    %176 = vector.broadcast %175 : vector<2x1xf32> to vector<2x256xf32>
    %177 = arith.mulf %172, %176 : vector<2x256xf32>
    %178 = vector.broadcast %173 : vector<1x256xf32> to vector<2x256xf32>
    %179 = arith.mulf %177, %178 : vector<2x256xf32>
    %180 = arith.addf %171, %179 : vector<2x256xf32>
    %c255_i32_102 = arith.constant 255 : i32
    %181 = tpu.dynamic_rotate %172 by %c255_i32_102 dim 1 : vector<2x256xf32>, i32 -> vector<2x256xf32>
    %c10_103 = arith.constant 10 : index
    %c0_104 = arith.constant 0 : index
    %182 = vector.load %arg2[%c10_103, %c0_104] : memref<14x256xf32, #tpu.memory_space<vmem>>, vector<1x256xf32>
    %c17 = arith.constant 17 : index
    %c0_105 = arith.constant 0 : index
    %c0_106 = arith.constant 0 : index
    %183 = vector.load %arg3[%c17, %c0_105, %c0_106] : memref<49x2x1xf32, #tpu.memory_space<vmem>>, vector<1x2x1xf32>
    %184 = vector.shape_cast %183 : vector<1x2x1xf32> to vector<2x1xf32>
    %185 = vector.broadcast %184 : vector<2x1xf32> to vector<2x256xf32>
    %186 = arith.mulf %181, %185 : vector<2x256xf32>
    %187 = vector.broadcast %182 : vector<1x256xf32> to vector<2x256xf32>
    %188 = arith.mulf %186, %187 : vector<2x256xf32>
    %189 = arith.addf %180, %188 : vector<2x256xf32>
    %c255_i32_107 = arith.constant 255 : i32
    %190 = tpu.dynamic_rotate %181 by %c255_i32_107 dim 1 : vector<2x256xf32>, i32 -> vector<2x256xf32>
    %c11_108 = arith.constant 11 : index
    %c0_109 = arith.constant 0 : index
    %191 = vector.load %arg2[%c11_108, %c0_109] : memref<14x256xf32, #tpu.memory_space<vmem>>, vector<1x256xf32>
    %c18 = arith.constant 18 : index
    %c0_110 = arith.constant 0 : index
    %c0_111 = arith.constant 0 : index
    %192 = vector.load %arg3[%c18, %c0_110, %c0_111] : memref<49x2x1xf32, #tpu.memory_space<vmem>>, vector<1x2x1xf32>
    %193 = vector.shape_cast %192 : vector<1x2x1xf32> to vector<2x1xf32>
    %194 = vector.broadcast %193 : vector<2x1xf32> to vector<2x256xf32>
    %195 = arith.mulf %190, %194 : vector<2x256xf32>
    %196 = vector.broadcast %191 : vector<1x256xf32> to vector<2x256xf32>
    %197 = arith.mulf %195, %196 : vector<2x256xf32>
    %198 = arith.addf %189, %197 : vector<2x256xf32>
    %c255_i32_112 = arith.constant 255 : i32
    %199 = tpu.dynamic_rotate %190 by %c255_i32_112 dim 1 : vector<2x256xf32>, i32 -> vector<2x256xf32>
    %c12_113 = arith.constant 12 : index
    %c0_114 = arith.constant 0 : index
    %200 = vector.load %arg2[%c12_113, %c0_114] : memref<14x256xf32, #tpu.memory_space<vmem>>, vector<1x256xf32>
    %c19 = arith.constant 19 : index
    %c0_115 = arith.constant 0 : index
    %c0_116 = arith.constant 0 : index
    %201 = vector.load %arg3[%c19, %c0_115, %c0_116] : memref<49x2x1xf32, #tpu.memory_space<vmem>>, vector<1x2x1xf32>
    %202 = vector.shape_cast %201 : vector<1x2x1xf32> to vector<2x1xf32>
    %203 = vector.broadcast %202 : vector<2x1xf32> to vector<2x256xf32>
    %204 = arith.mulf %199, %203 : vector<2x256xf32>
    %205 = vector.broadcast %200 : vector<1x256xf32> to vector<2x256xf32>
    %206 = arith.mulf %204, %205 : vector<2x256xf32>
    %207 = arith.addf %198, %206 : vector<2x256xf32>
    %c255_i32_117 = arith.constant 255 : i32
    %208 = tpu.dynamic_rotate %199 by %c255_i32_117 dim 1 : vector<2x256xf32>, i32 -> vector<2x256xf32>
    %c13_118 = arith.constant 13 : index
    %c0_119 = arith.constant 0 : index
    %209 = vector.load %arg2[%c13_118, %c0_119] : memref<14x256xf32, #tpu.memory_space<vmem>>, vector<1x256xf32>
    %c20 = arith.constant 20 : index
    %c0_120 = arith.constant 0 : index
    %c0_121 = arith.constant 0 : index
    %210 = vector.load %arg3[%c20, %c0_120, %c0_121] : memref<49x2x1xf32, #tpu.memory_space<vmem>>, vector<1x2x1xf32>
    %211 = vector.shape_cast %210 : vector<1x2x1xf32> to vector<2x1xf32>
    %212 = vector.broadcast %211 : vector<2x1xf32> to vector<2x256xf32>
    %213 = arith.mulf %208, %212 : vector<2x256xf32>
    %214 = vector.broadcast %209 : vector<1x256xf32> to vector<2x256xf32>
    %215 = arith.mulf %213, %214 : vector<2x256xf32>
    %216 = arith.addf %207, %215 : vector<2x256xf32>
    %c240_i32_122 = arith.constant 240 : i32
    %217 = tpu.dynamic_rotate %150 by %c240_i32_122 dim 1 : vector<2x256xf32>, i32 -> vector<2x256xf32>
    %c3_123 = arith.constant 3 : index
    %c0_124 = arith.constant 0 : index
    %218 = vector.load %arg2[%c3_123, %c0_124] : memref<14x256xf32, #tpu.memory_space<vmem>>, vector<1x256xf32>
    %219 = vector.broadcast %218 : vector<1x256xf32> to vector<2x256xf32>
    %220 = arith.mulf %217, %219 : vector<2x256xf32>
    %c3_i32_125 = arith.constant 3 : i32
    %221 = tpu.dynamic_rotate %220 by %c3_i32_125 dim 1 : vector<2x256xf32>, i32 -> vector<2x256xf32>
    %c7_126 = arith.constant 7 : index
    %c0_127 = arith.constant 0 : index
    %222 = vector.load %arg2[%c7_126, %c0_127] : memref<14x256xf32, #tpu.memory_space<vmem>>, vector<1x256xf32>
    %c21 = arith.constant 21 : index
    %c0_128 = arith.constant 0 : index
    %c0_129 = arith.constant 0 : index
    %223 = vector.load %arg3[%c21, %c0_128, %c0_129] : memref<49x2x1xf32, #tpu.memory_space<vmem>>, vector<1x2x1xf32>
    %224 = vector.shape_cast %223 : vector<1x2x1xf32> to vector<2x1xf32>
    %225 = vector.broadcast %224 : vector<2x1xf32> to vector<2x256xf32>
    %226 = arith.mulf %221, %225 : vector<2x256xf32>
    %227 = vector.broadcast %222 : vector<1x256xf32> to vector<2x256xf32>
    %228 = arith.mulf %226, %227 : vector<2x256xf32>
    %229 = arith.addf %216, %228 : vector<2x256xf32>
    %c255_i32_130 = arith.constant 255 : i32
    %230 = tpu.dynamic_rotate %221 by %c255_i32_130 dim 1 : vector<2x256xf32>, i32 -> vector<2x256xf32>
    %c8_131 = arith.constant 8 : index
    %c0_132 = arith.constant 0 : index
    %231 = vector.load %arg2[%c8_131, %c0_132] : memref<14x256xf32, #tpu.memory_space<vmem>>, vector<1x256xf32>
    %c22 = arith.constant 22 : index
    %c0_133 = arith.constant 0 : index
    %c0_134 = arith.constant 0 : index
    %232 = vector.load %arg3[%c22, %c0_133, %c0_134] : memref<49x2x1xf32, #tpu.memory_space<vmem>>, vector<1x2x1xf32>
    %233 = vector.shape_cast %232 : vector<1x2x1xf32> to vector<2x1xf32>
    %234 = vector.broadcast %233 : vector<2x1xf32> to vector<2x256xf32>
    %235 = arith.mulf %230, %234 : vector<2x256xf32>
    %236 = vector.broadcast %231 : vector<1x256xf32> to vector<2x256xf32>
    %237 = arith.mulf %235, %236 : vector<2x256xf32>
    %238 = arith.addf %229, %237 : vector<2x256xf32>
    %c255_i32_135 = arith.constant 255 : i32
    %239 = tpu.dynamic_rotate %230 by %c255_i32_135 dim 1 : vector<2x256xf32>, i32 -> vector<2x256xf32>
    %c9_136 = arith.constant 9 : index
    %c0_137 = arith.constant 0 : index
    %240 = vector.load %arg2[%c9_136, %c0_137] : memref<14x256xf32, #tpu.memory_space<vmem>>, vector<1x256xf32>
    %c23 = arith.constant 23 : index
    %c0_138 = arith.constant 0 : index
    %c0_139 = arith.constant 0 : index
    %241 = vector.load %arg3[%c23, %c0_138, %c0_139] : memref<49x2x1xf32, #tpu.memory_space<vmem>>, vector<1x2x1xf32>
    %242 = vector.shape_cast %241 : vector<1x2x1xf32> to vector<2x1xf32>
    %243 = vector.broadcast %242 : vector<2x1xf32> to vector<2x256xf32>
    %244 = arith.mulf %239, %243 : vector<2x256xf32>
    %245 = vector.broadcast %240 : vector<1x256xf32> to vector<2x256xf32>
    %246 = arith.mulf %244, %245 : vector<2x256xf32>
    %247 = arith.addf %238, %246 : vector<2x256xf32>
    %c255_i32_140 = arith.constant 255 : i32
    %248 = tpu.dynamic_rotate %239 by %c255_i32_140 dim 1 : vector<2x256xf32>, i32 -> vector<2x256xf32>
    %c10_141 = arith.constant 10 : index
    %c0_142 = arith.constant 0 : index
    %249 = vector.load %arg2[%c10_141, %c0_142] : memref<14x256xf32, #tpu.memory_space<vmem>>, vector<1x256xf32>
    %c24 = arith.constant 24 : index
    %c0_143 = arith.constant 0 : index
    %c0_144 = arith.constant 0 : index
    %250 = vector.load %arg3[%c24, %c0_143, %c0_144] : memref<49x2x1xf32, #tpu.memory_space<vmem>>, vector<1x2x1xf32>
    %251 = vector.shape_cast %250 : vector<1x2x1xf32> to vector<2x1xf32>
    %252 = vector.broadcast %251 : vector<2x1xf32> to vector<2x256xf32>
    %253 = arith.mulf %248, %252 : vector<2x256xf32>
    %254 = vector.broadcast %249 : vector<1x256xf32> to vector<2x256xf32>
    %255 = arith.mulf %253, %254 : vector<2x256xf32>
    %256 = arith.addf %247, %255 : vector<2x256xf32>
    %c255_i32_145 = arith.constant 255 : i32
    %257 = tpu.dynamic_rotate %248 by %c255_i32_145 dim 1 : vector<2x256xf32>, i32 -> vector<2x256xf32>
    %c11_146 = arith.constant 11 : index
    %c0_147 = arith.constant 0 : index
    %258 = vector.load %arg2[%c11_146, %c0_147] : memref<14x256xf32, #tpu.memory_space<vmem>>, vector<1x256xf32>
    %c25 = arith.constant 25 : index
    %c0_148 = arith.constant 0 : index
    %c0_149 = arith.constant 0 : index
    %259 = vector.load %arg3[%c25, %c0_148, %c0_149] : memref<49x2x1xf32, #tpu.memory_space<vmem>>, vector<1x2x1xf32>
    %260 = vector.shape_cast %259 : vector<1x2x1xf32> to vector<2x1xf32>
    %261 = vector.broadcast %260 : vector<2x1xf32> to vector<2x256xf32>
    %262 = arith.mulf %257, %261 : vector<2x256xf32>
    %263 = vector.broadcast %258 : vector<1x256xf32> to vector<2x256xf32>
    %264 = arith.mulf %262, %263 : vector<2x256xf32>
    %265 = arith.addf %256, %264 : vector<2x256xf32>
    %c255_i32_150 = arith.constant 255 : i32
    %266 = tpu.dynamic_rotate %257 by %c255_i32_150 dim 1 : vector<2x256xf32>, i32 -> vector<2x256xf32>
    %c12_151 = arith.constant 12 : index
    %c0_152 = arith.constant 0 : index
    %267 = vector.load %arg2[%c12_151, %c0_152] : memref<14x256xf32, #tpu.memory_space<vmem>>, vector<1x256xf32>
    %c26 = arith.constant 26 : index
    %c0_153 = arith.constant 0 : index
    %c0_154 = arith.constant 0 : index
    %268 = vector.load %arg3[%c26, %c0_153, %c0_154] : memref<49x2x1xf32, #tpu.memory_space<vmem>>, vector<1x2x1xf32>
    %269 = vector.shape_cast %268 : vector<1x2x1xf32> to vector<2x1xf32>
    %270 = vector.broadcast %269 : vector<2x1xf32> to vector<2x256xf32>
    %271 = arith.mulf %266, %270 : vector<2x256xf32>
    %272 = vector.broadcast %267 : vector<1x256xf32> to vector<2x256xf32>
    %273 = arith.mulf %271, %272 : vector<2x256xf32>
    %274 = arith.addf %265, %273 : vector<2x256xf32>
    %c255_i32_155 = arith.constant 255 : i32
    %275 = tpu.dynamic_rotate %266 by %c255_i32_155 dim 1 : vector<2x256xf32>, i32 -> vector<2x256xf32>
    %c13_156 = arith.constant 13 : index
    %c0_157 = arith.constant 0 : index
    %276 = vector.load %arg2[%c13_156, %c0_157] : memref<14x256xf32, #tpu.memory_space<vmem>>, vector<1x256xf32>
    %c27 = arith.constant 27 : index
    %c0_158 = arith.constant 0 : index
    %c0_159 = arith.constant 0 : index
    %277 = vector.load %arg3[%c27, %c0_158, %c0_159] : memref<49x2x1xf32, #tpu.memory_space<vmem>>, vector<1x2x1xf32>
    %278 = vector.shape_cast %277 : vector<1x2x1xf32> to vector<2x1xf32>
    %279 = vector.broadcast %278 : vector<2x1xf32> to vector<2x256xf32>
    %280 = arith.mulf %275, %279 : vector<2x256xf32>
    %281 = vector.broadcast %276 : vector<1x256xf32> to vector<2x256xf32>
    %282 = arith.mulf %280, %281 : vector<2x256xf32>
    %283 = arith.addf %274, %282 : vector<2x256xf32>
    %c240_i32_160 = arith.constant 240 : i32
    %284 = tpu.dynamic_rotate %217 by %c240_i32_160 dim 1 : vector<2x256xf32>, i32 -> vector<2x256xf32>
    %c4_161 = arith.constant 4 : index
    %c0_162 = arith.constant 0 : index
    %285 = vector.load %arg2[%c4_161, %c0_162] : memref<14x256xf32, #tpu.memory_space<vmem>>, vector<1x256xf32>
    %286 = vector.broadcast %285 : vector<1x256xf32> to vector<2x256xf32>
    %287 = arith.mulf %284, %286 : vector<2x256xf32>
    %c3_i32_163 = arith.constant 3 : i32
    %288 = tpu.dynamic_rotate %287 by %c3_i32_163 dim 1 : vector<2x256xf32>, i32 -> vector<2x256xf32>
    %c7_164 = arith.constant 7 : index
    %c0_165 = arith.constant 0 : index
    %289 = vector.load %arg2[%c7_164, %c0_165] : memref<14x256xf32, #tpu.memory_space<vmem>>, vector<1x256xf32>
    %c28 = arith.constant 28 : index
    %c0_166 = arith.constant 0 : index
    %c0_167 = arith.constant 0 : index
    %290 = vector.load %arg3[%c28, %c0_166, %c0_167] : memref<49x2x1xf32, #tpu.memory_space<vmem>>, vector<1x2x1xf32>
    %291 = vector.shape_cast %290 : vector<1x2x1xf32> to vector<2x1xf32>
    %292 = vector.broadcast %291 : vector<2x1xf32> to vector<2x256xf32>
    %293 = arith.mulf %288, %292 : vector<2x256xf32>
    %294 = vector.broadcast %289 : vector<1x256xf32> to vector<2x256xf32>
    %295 = arith.mulf %293, %294 : vector<2x256xf32>
    %296 = arith.addf %283, %295 : vector<2x256xf32>
    %c255_i32_168 = arith.constant 255 : i32
    %297 = tpu.dynamic_rotate %288 by %c255_i32_168 dim 1 : vector<2x256xf32>, i32 -> vector<2x256xf32>
    %c8_169 = arith.constant 8 : index
    %c0_170 = arith.constant 0 : index
    %298 = vector.load %arg2[%c8_169, %c0_170] : memref<14x256xf32, #tpu.memory_space<vmem>>, vector<1x256xf32>
    %c29 = arith.constant 29 : index
    %c0_171 = arith.constant 0 : index
    %c0_172 = arith.constant 0 : index
    %299 = vector.load %arg3[%c29, %c0_171, %c0_172] : memref<49x2x1xf32, #tpu.memory_space<vmem>>, vector<1x2x1xf32>
    %300 = vector.shape_cast %299 : vector<1x2x1xf32> to vector<2x1xf32>
    %301 = vector.broadcast %300 : vector<2x1xf32> to vector<2x256xf32>
    %302 = arith.mulf %297, %301 : vector<2x256xf32>
    %303 = vector.broadcast %298 : vector<1x256xf32> to vector<2x256xf32>
    %304 = arith.mulf %302, %303 : vector<2x256xf32>
    %305 = arith.addf %296, %304 : vector<2x256xf32>
    %c255_i32_173 = arith.constant 255 : i32
    %306 = tpu.dynamic_rotate %297 by %c255_i32_173 dim 1 : vector<2x256xf32>, i32 -> vector<2x256xf32>
    %c9_174 = arith.constant 9 : index
    %c0_175 = arith.constant 0 : index
    %307 = vector.load %arg2[%c9_174, %c0_175] : memref<14x256xf32, #tpu.memory_space<vmem>>, vector<1x256xf32>
    %c30 = arith.constant 30 : index
    %c0_176 = arith.constant 0 : index
    %c0_177 = arith.constant 0 : index
    %308 = vector.load %arg3[%c30, %c0_176, %c0_177] : memref<49x2x1xf32, #tpu.memory_space<vmem>>, vector<1x2x1xf32>
    %309 = vector.shape_cast %308 : vector<1x2x1xf32> to vector<2x1xf32>
    %310 = vector.broadcast %309 : vector<2x1xf32> to vector<2x256xf32>
    %311 = arith.mulf %306, %310 : vector<2x256xf32>
    %312 = vector.broadcast %307 : vector<1x256xf32> to vector<2x256xf32>
    %313 = arith.mulf %311, %312 : vector<2x256xf32>
    %314 = arith.addf %305, %313 : vector<2x256xf32>
    %c255_i32_178 = arith.constant 255 : i32
    %315 = tpu.dynamic_rotate %306 by %c255_i32_178 dim 1 : vector<2x256xf32>, i32 -> vector<2x256xf32>
    %c10_179 = arith.constant 10 : index
    %c0_180 = arith.constant 0 : index
    %316 = vector.load %arg2[%c10_179, %c0_180] : memref<14x256xf32, #tpu.memory_space<vmem>>, vector<1x256xf32>
    %c31 = arith.constant 31 : index
    %c0_181 = arith.constant 0 : index
    %c0_182 = arith.constant 0 : index
    %317 = vector.load %arg3[%c31, %c0_181, %c0_182] : memref<49x2x1xf32, #tpu.memory_space<vmem>>, vector<1x2x1xf32>
    %318 = vector.shape_cast %317 : vector<1x2x1xf32> to vector<2x1xf32>
    %319 = vector.broadcast %318 : vector<2x1xf32> to vector<2x256xf32>
    %320 = arith.mulf %315, %319 : vector<2x256xf32>
    %321 = vector.broadcast %316 : vector<1x256xf32> to vector<2x256xf32>
    %322 = arith.mulf %320, %321 : vector<2x256xf32>
    %323 = arith.addf %314, %322 : vector<2x256xf32>
    %c255_i32_183 = arith.constant 255 : i32
    %324 = tpu.dynamic_rotate %315 by %c255_i32_183 dim 1 : vector<2x256xf32>, i32 -> vector<2x256xf32>
    %c11_184 = arith.constant 11 : index
    %c0_185 = arith.constant 0 : index
    %325 = vector.load %arg2[%c11_184, %c0_185] : memref<14x256xf32, #tpu.memory_space<vmem>>, vector<1x256xf32>
    %c32 = arith.constant 32 : index
    %c0_186 = arith.constant 0 : index
    %c0_187 = arith.constant 0 : index
    %326 = vector.load %arg3[%c32, %c0_186, %c0_187] : memref<49x2x1xf32, #tpu.memory_space<vmem>>, vector<1x2x1xf32>
    %327 = vector.shape_cast %326 : vector<1x2x1xf32> to vector<2x1xf32>
    %328 = vector.broadcast %327 : vector<2x1xf32> to vector<2x256xf32>
    %329 = arith.mulf %324, %328 : vector<2x256xf32>
    %330 = vector.broadcast %325 : vector<1x256xf32> to vector<2x256xf32>
    %331 = arith.mulf %329, %330 : vector<2x256xf32>
    %332 = arith.addf %323, %331 : vector<2x256xf32>
    %c255_i32_188 = arith.constant 255 : i32
    %333 = tpu.dynamic_rotate %324 by %c255_i32_188 dim 1 : vector<2x256xf32>, i32 -> vector<2x256xf32>
    %c12_189 = arith.constant 12 : index
    %c0_190 = arith.constant 0 : index
    %334 = vector.load %arg2[%c12_189, %c0_190] : memref<14x256xf32, #tpu.memory_space<vmem>>, vector<1x256xf32>
    %c33 = arith.constant 33 : index
    %c0_191 = arith.constant 0 : index
    %c0_192 = arith.constant 0 : index
    %335 = vector.load %arg3[%c33, %c0_191, %c0_192] : memref<49x2x1xf32, #tpu.memory_space<vmem>>, vector<1x2x1xf32>
    %336 = vector.shape_cast %335 : vector<1x2x1xf32> to vector<2x1xf32>
    %337 = vector.broadcast %336 : vector<2x1xf32> to vector<2x256xf32>
    %338 = arith.mulf %333, %337 : vector<2x256xf32>
    %339 = vector.broadcast %334 : vector<1x256xf32> to vector<2x256xf32>
    %340 = arith.mulf %338, %339 : vector<2x256xf32>
    %341 = arith.addf %332, %340 : vector<2x256xf32>
    %c255_i32_193 = arith.constant 255 : i32
    %342 = tpu.dynamic_rotate %333 by %c255_i32_193 dim 1 : vector<2x256xf32>, i32 -> vector<2x256xf32>
    %c13_194 = arith.constant 13 : index
    %c0_195 = arith.constant 0 : index
    %343 = vector.load %arg2[%c13_194, %c0_195] : memref<14x256xf32, #tpu.memory_space<vmem>>, vector<1x256xf32>
    %c34 = arith.constant 34 : index
    %c0_196 = arith.constant 0 : index
    %c0_197 = arith.constant 0 : index
    %344 = vector.load %arg3[%c34, %c0_196, %c0_197] : memref<49x2x1xf32, #tpu.memory_space<vmem>>, vector<1x2x1xf32>
    %345 = vector.shape_cast %344 : vector<1x2x1xf32> to vector<2x1xf32>
    %346 = vector.broadcast %345 : vector<2x1xf32> to vector<2x256xf32>
    %347 = arith.mulf %342, %346 : vector<2x256xf32>
    %348 = vector.broadcast %343 : vector<1x256xf32> to vector<2x256xf32>
    %349 = arith.mulf %347, %348 : vector<2x256xf32>
    %350 = arith.addf %341, %349 : vector<2x256xf32>
    %c240_i32_198 = arith.constant 240 : i32
    %351 = tpu.dynamic_rotate %284 by %c240_i32_198 dim 1 : vector<2x256xf32>, i32 -> vector<2x256xf32>
    %c5_199 = arith.constant 5 : index
    %c0_200 = arith.constant 0 : index
    %352 = vector.load %arg2[%c5_199, %c0_200] : memref<14x256xf32, #tpu.memory_space<vmem>>, vector<1x256xf32>
    %353 = vector.broadcast %352 : vector<1x256xf32> to vector<2x256xf32>
    %354 = arith.mulf %351, %353 : vector<2x256xf32>
    %c3_i32_201 = arith.constant 3 : i32
    %355 = tpu.dynamic_rotate %354 by %c3_i32_201 dim 1 : vector<2x256xf32>, i32 -> vector<2x256xf32>
    %c7_202 = arith.constant 7 : index
    %c0_203 = arith.constant 0 : index
    %356 = vector.load %arg2[%c7_202, %c0_203] : memref<14x256xf32, #tpu.memory_space<vmem>>, vector<1x256xf32>
    %c35 = arith.constant 35 : index
    %c0_204 = arith.constant 0 : index
    %c0_205 = arith.constant 0 : index
    %357 = vector.load %arg3[%c35, %c0_204, %c0_205] : memref<49x2x1xf32, #tpu.memory_space<vmem>>, vector<1x2x1xf32>
    %358 = vector.shape_cast %357 : vector<1x2x1xf32> to vector<2x1xf32>
    %359 = vector.broadcast %358 : vector<2x1xf32> to vector<2x256xf32>
    %360 = arith.mulf %355, %359 : vector<2x256xf32>
    %361 = vector.broadcast %356 : vector<1x256xf32> to vector<2x256xf32>
    %362 = arith.mulf %360, %361 : vector<2x256xf32>
    %363 = arith.addf %350, %362 : vector<2x256xf32>
    %c255_i32_206 = arith.constant 255 : i32
    %364 = tpu.dynamic_rotate %355 by %c255_i32_206 dim 1 : vector<2x256xf32>, i32 -> vector<2x256xf32>
    %c8_207 = arith.constant 8 : index
    %c0_208 = arith.constant 0 : index
    %365 = vector.load %arg2[%c8_207, %c0_208] : memref<14x256xf32, #tpu.memory_space<vmem>>, vector<1x256xf32>
    %c36 = arith.constant 36 : index
    %c0_209 = arith.constant 0 : index
    %c0_210 = arith.constant 0 : index
    %366 = vector.load %arg3[%c36, %c0_209, %c0_210] : memref<49x2x1xf32, #tpu.memory_space<vmem>>, vector<1x2x1xf32>
    %367 = vector.shape_cast %366 : vector<1x2x1xf32> to vector<2x1xf32>
    %368 = vector.broadcast %367 : vector<2x1xf32> to vector<2x256xf32>
    %369 = arith.mulf %364, %368 : vector<2x256xf32>
    %370 = vector.broadcast %365 : vector<1x256xf32> to vector<2x256xf32>
    %371 = arith.mulf %369, %370 : vector<2x256xf32>
    %372 = arith.addf %363, %371 : vector<2x256xf32>
    %c255_i32_211 = arith.constant 255 : i32
    %373 = tpu.dynamic_rotate %364 by %c255_i32_211 dim 1 : vector<2x256xf32>, i32 -> vector<2x256xf32>
    %c9_212 = arith.constant 9 : index
    %c0_213 = arith.constant 0 : index
    %374 = vector.load %arg2[%c9_212, %c0_213] : memref<14x256xf32, #tpu.memory_space<vmem>>, vector<1x256xf32>
    %c37 = arith.constant 37 : index
    %c0_214 = arith.constant 0 : index
    %c0_215 = arith.constant 0 : index
    %375 = vector.load %arg3[%c37, %c0_214, %c0_215] : memref<49x2x1xf32, #tpu.memory_space<vmem>>, vector<1x2x1xf32>
    %376 = vector.shape_cast %375 : vector<1x2x1xf32> to vector<2x1xf32>
    %377 = vector.broadcast %376 : vector<2x1xf32> to vector<2x256xf32>
    %378 = arith.mulf %373, %377 : vector<2x256xf32>
    %379 = vector.broadcast %374 : vector<1x256xf32> to vector<2x256xf32>
    %380 = arith.mulf %378, %379 : vector<2x256xf32>
    %381 = arith.addf %372, %380 : vector<2x256xf32>
    %c255_i32_216 = arith.constant 255 : i32
    %382 = tpu.dynamic_rotate %373 by %c255_i32_216 dim 1 : vector<2x256xf32>, i32 -> vector<2x256xf32>
    %c10_217 = arith.constant 10 : index
    %c0_218 = arith.constant 0 : index
    %383 = vector.load %arg2[%c10_217, %c0_218] : memref<14x256xf32, #tpu.memory_space<vmem>>, vector<1x256xf32>
    %c38 = arith.constant 38 : index
    %c0_219 = arith.constant 0 : index
    %c0_220 = arith.constant 0 : index
    %384 = vector.load %arg3[%c38, %c0_219, %c0_220] : memref<49x2x1xf32, #tpu.memory_space<vmem>>, vector<1x2x1xf32>
    %385 = vector.shape_cast %384 : vector<1x2x1xf32> to vector<2x1xf32>
    %386 = vector.broadcast %385 : vector<2x1xf32> to vector<2x256xf32>
    %387 = arith.mulf %382, %386 : vector<2x256xf32>
    %388 = vector.broadcast %383 : vector<1x256xf32> to vector<2x256xf32>
    %389 = arith.mulf %387, %388 : vector<2x256xf32>
    %390 = arith.addf %381, %389 : vector<2x256xf32>
    %c255_i32_221 = arith.constant 255 : i32
    %391 = tpu.dynamic_rotate %382 by %c255_i32_221 dim 1 : vector<2x256xf32>, i32 -> vector<2x256xf32>
    %c11_222 = arith.constant 11 : index
    %c0_223 = arith.constant 0 : index
    %392 = vector.load %arg2[%c11_222, %c0_223] : memref<14x256xf32, #tpu.memory_space<vmem>>, vector<1x256xf32>
    %c39 = arith.constant 39 : index
    %c0_224 = arith.constant 0 : index
    %c0_225 = arith.constant 0 : index
    %393 = vector.load %arg3[%c39, %c0_224, %c0_225] : memref<49x2x1xf32, #tpu.memory_space<vmem>>, vector<1x2x1xf32>
    %394 = vector.shape_cast %393 : vector<1x2x1xf32> to vector<2x1xf32>
    %395 = vector.broadcast %394 : vector<2x1xf32> to vector<2x256xf32>
    %396 = arith.mulf %391, %395 : vector<2x256xf32>
    %397 = vector.broadcast %392 : vector<1x256xf32> to vector<2x256xf32>
    %398 = arith.mulf %396, %397 : vector<2x256xf32>
    %399 = arith.addf %390, %398 : vector<2x256xf32>
    %c255_i32_226 = arith.constant 255 : i32
    %400 = tpu.dynamic_rotate %391 by %c255_i32_226 dim 1 : vector<2x256xf32>, i32 -> vector<2x256xf32>
    %c12_227 = arith.constant 12 : index
    %c0_228 = arith.constant 0 : index
    %401 = vector.load %arg2[%c12_227, %c0_228] : memref<14x256xf32, #tpu.memory_space<vmem>>, vector<1x256xf32>
    %c40 = arith.constant 40 : index
    %c0_229 = arith.constant 0 : index
    %c0_230 = arith.constant 0 : index
    %402 = vector.load %arg3[%c40, %c0_229, %c0_230] : memref<49x2x1xf32, #tpu.memory_space<vmem>>, vector<1x2x1xf32>
    %403 = vector.shape_cast %402 : vector<1x2x1xf32> to vector<2x1xf32>
    %404 = vector.broadcast %403 : vector<2x1xf32> to vector<2x256xf32>
    %405 = arith.mulf %400, %404 : vector<2x256xf32>
    %406 = vector.broadcast %401 : vector<1x256xf32> to vector<2x256xf32>
    %407 = arith.mulf %405, %406 : vector<2x256xf32>
    %408 = arith.addf %399, %407 : vector<2x256xf32>
    %c255_i32_231 = arith.constant 255 : i32
    %409 = tpu.dynamic_rotate %400 by %c255_i32_231 dim 1 : vector<2x256xf32>, i32 -> vector<2x256xf32>
    %c13_232 = arith.constant 13 : index
    %c0_233 = arith.constant 0 : index
    %410 = vector.load %arg2[%c13_232, %c0_233] : memref<14x256xf32, #tpu.memory_space<vmem>>, vector<1x256xf32>
    %c41 = arith.constant 41 : index
    %c0_234 = arith.constant 0 : index
    %c0_235 = arith.constant 0 : index
    %411 = vector.load %arg3[%c41, %c0_234, %c0_235] : memref<49x2x1xf32, #tpu.memory_space<vmem>>, vector<1x2x1xf32>
    %412 = vector.shape_cast %411 : vector<1x2x1xf32> to vector<2x1xf32>
    %413 = vector.broadcast %412 : vector<2x1xf32> to vector<2x256xf32>
    %414 = arith.mulf %409, %413 : vector<2x256xf32>
    %415 = vector.broadcast %410 : vector<1x256xf32> to vector<2x256xf32>
    %416 = arith.mulf %414, %415 : vector<2x256xf32>
    %417 = arith.addf %408, %416 : vector<2x256xf32>
    %c240_i32_236 = arith.constant 240 : i32
    %418 = tpu.dynamic_rotate %351 by %c240_i32_236 dim 1 : vector<2x256xf32>, i32 -> vector<2x256xf32>
    %c6_237 = arith.constant 6 : index
    %c0_238 = arith.constant 0 : index
    %419 = vector.load %arg2[%c6_237, %c0_238] : memref<14x256xf32, #tpu.memory_space<vmem>>, vector<1x256xf32>
    %420 = vector.broadcast %419 : vector<1x256xf32> to vector<2x256xf32>
    %421 = arith.mulf %418, %420 : vector<2x256xf32>
    %c3_i32_239 = arith.constant 3 : i32
    %422 = tpu.dynamic_rotate %421 by %c3_i32_239 dim 1 : vector<2x256xf32>, i32 -> vector<2x256xf32>
    %c7_240 = arith.constant 7 : index
    %c0_241 = arith.constant 0 : index
    %423 = vector.load %arg2[%c7_240, %c0_241] : memref<14x256xf32, #tpu.memory_space<vmem>>, vector<1x256xf32>
    %c42 = arith.constant 42 : index
    %c0_242 = arith.constant 0 : index
    %c0_243 = arith.constant 0 : index
    %424 = vector.load %arg3[%c42, %c0_242, %c0_243] : memref<49x2x1xf32, #tpu.memory_space<vmem>>, vector<1x2x1xf32>
    %425 = vector.shape_cast %424 : vector<1x2x1xf32> to vector<2x1xf32>
    %426 = vector.broadcast %425 : vector<2x1xf32> to vector<2x256xf32>
    %427 = arith.mulf %422, %426 : vector<2x256xf32>
    %428 = vector.broadcast %423 : vector<1x256xf32> to vector<2x256xf32>
    %429 = arith.mulf %427, %428 : vector<2x256xf32>
    %430 = arith.addf %417, %429 : vector<2x256xf32>
    %c255_i32_244 = arith.constant 255 : i32
    %431 = tpu.dynamic_rotate %422 by %c255_i32_244 dim 1 : vector<2x256xf32>, i32 -> vector<2x256xf32>
    %c8_245 = arith.constant 8 : index
    %c0_246 = arith.constant 0 : index
    %432 = vector.load %arg2[%c8_245, %c0_246] : memref<14x256xf32, #tpu.memory_space<vmem>>, vector<1x256xf32>
    %c43 = arith.constant 43 : index
    %c0_247 = arith.constant 0 : index
    %c0_248 = arith.constant 0 : index
    %433 = vector.load %arg3[%c43, %c0_247, %c0_248] : memref<49x2x1xf32, #tpu.memory_space<vmem>>, vector<1x2x1xf32>
    %434 = vector.shape_cast %433 : vector<1x2x1xf32> to vector<2x1xf32>
    %435 = vector.broadcast %434 : vector<2x1xf32> to vector<2x256xf32>
    %436 = arith.mulf %431, %435 : vector<2x256xf32>
    %437 = vector.broadcast %432 : vector<1x256xf32> to vector<2x256xf32>
    %438 = arith.mulf %436, %437 : vector<2x256xf32>
    %439 = arith.addf %430, %438 : vector<2x256xf32>
    %c255_i32_249 = arith.constant 255 : i32
    %440 = tpu.dynamic_rotate %431 by %c255_i32_249 dim 1 : vector<2x256xf32>, i32 -> vector<2x256xf32>
    %c9_250 = arith.constant 9 : index
    %c0_251 = arith.constant 0 : index
    %441 = vector.load %arg2[%c9_250, %c0_251] : memref<14x256xf32, #tpu.memory_space<vmem>>, vector<1x256xf32>
    %c44 = arith.constant 44 : index
    %c0_252 = arith.constant 0 : index
    %c0_253 = arith.constant 0 : index
    %442 = vector.load %arg3[%c44, %c0_252, %c0_253] : memref<49x2x1xf32, #tpu.memory_space<vmem>>, vector<1x2x1xf32>
    %443 = vector.shape_cast %442 : vector<1x2x1xf32> to vector<2x1xf32>
    %444 = vector.broadcast %443 : vector<2x1xf32> to vector<2x256xf32>
    %445 = arith.mulf %440, %444 : vector<2x256xf32>
    %446 = vector.broadcast %441 : vector<1x256xf32> to vector<2x256xf32>
    %447 = arith.mulf %445, %446 : vector<2x256xf32>
    %448 = arith.addf %439, %447 : vector<2x256xf32>
    %c255_i32_254 = arith.constant 255 : i32
    %449 = tpu.dynamic_rotate %440 by %c255_i32_254 dim 1 : vector<2x256xf32>, i32 -> vector<2x256xf32>
    %c10_255 = arith.constant 10 : index
    %c0_256 = arith.constant 0 : index
    %450 = vector.load %arg2[%c10_255, %c0_256] : memref<14x256xf32, #tpu.memory_space<vmem>>, vector<1x256xf32>
    %c45 = arith.constant 45 : index
    %c0_257 = arith.constant 0 : index
    %c0_258 = arith.constant 0 : index
    %451 = vector.load %arg3[%c45, %c0_257, %c0_258] : memref<49x2x1xf32, #tpu.memory_space<vmem>>, vector<1x2x1xf32>
    %452 = vector.shape_cast %451 : vector<1x2x1xf32> to vector<2x1xf32>
    %453 = vector.broadcast %452 : vector<2x1xf32> to vector<2x256xf32>
    %454 = arith.mulf %449, %453 : vector<2x256xf32>
    %455 = vector.broadcast %450 : vector<1x256xf32> to vector<2x256xf32>
    %456 = arith.mulf %454, %455 : vector<2x256xf32>
    %457 = arith.addf %448, %456 : vector<2x256xf32>
    %c255_i32_259 = arith.constant 255 : i32
    %458 = tpu.dynamic_rotate %449 by %c255_i32_259 dim 1 : vector<2x256xf32>, i32 -> vector<2x256xf32>
    %c11_260 = arith.constant 11 : index
    %c0_261 = arith.constant 0 : index
    %459 = vector.load %arg2[%c11_260, %c0_261] : memref<14x256xf32, #tpu.memory_space<vmem>>, vector<1x256xf32>
    %c46 = arith.constant 46 : index
    %c0_262 = arith.constant 0 : index
    %c0_263 = arith.constant 0 : index
    %460 = vector.load %arg3[%c46, %c0_262, %c0_263] : memref<49x2x1xf32, #tpu.memory_space<vmem>>, vector<1x2x1xf32>
    %461 = vector.shape_cast %460 : vector<1x2x1xf32> to vector<2x1xf32>
    %462 = vector.broadcast %461 : vector<2x1xf32> to vector<2x256xf32>
    %463 = arith.mulf %458, %462 : vector<2x256xf32>
    %464 = vector.broadcast %459 : vector<1x256xf32> to vector<2x256xf32>
    %465 = arith.mulf %463, %464 : vector<2x256xf32>
    %466 = arith.addf %457, %465 : vector<2x256xf32>
    %c255_i32_264 = arith.constant 255 : i32
    %467 = tpu.dynamic_rotate %458 by %c255_i32_264 dim 1 : vector<2x256xf32>, i32 -> vector<2x256xf32>
    %c12_265 = arith.constant 12 : index
    %c0_266 = arith.constant 0 : index
    %468 = vector.load %arg2[%c12_265, %c0_266] : memref<14x256xf32, #tpu.memory_space<vmem>>, vector<1x256xf32>
    %c47 = arith.constant 47 : index
    %c0_267 = arith.constant 0 : index
    %c0_268 = arith.constant 0 : index
    %469 = vector.load %arg3[%c47, %c0_267, %c0_268] : memref<49x2x1xf32, #tpu.memory_space<vmem>>, vector<1x2x1xf32>
    %470 = vector.shape_cast %469 : vector<1x2x1xf32> to vector<2x1xf32>
    %471 = vector.broadcast %470 : vector<2x1xf32> to vector<2x256xf32>
    %472 = arith.mulf %467, %471 : vector<2x256xf32>
    %473 = vector.broadcast %468 : vector<1x256xf32> to vector<2x256xf32>
    %474 = arith.mulf %472, %473 : vector<2x256xf32>
    %475 = arith.addf %466, %474 : vector<2x256xf32>
    %c255_i32_269 = arith.constant 255 : i32
    %476 = tpu.dynamic_rotate %467 by %c255_i32_269 dim 1 : vector<2x256xf32>, i32 -> vector<2x256xf32>
    %c13_270 = arith.constant 13 : index
    %c0_271 = arith.constant 0 : index
    %477 = vector.load %arg2[%c13_270, %c0_271] : memref<14x256xf32, #tpu.memory_space<vmem>>, vector<1x256xf32>
    %c48 = arith.constant 48 : index
    %c0_272 = arith.constant 0 : index
    %c0_273 = arith.constant 0 : index
    %478 = vector.load %arg3[%c48, %c0_272, %c0_273] : memref<49x2x1xf32, #tpu.memory_space<vmem>>, vector<1x2x1xf32>
    %479 = vector.shape_cast %478 : vector<1x2x1xf32> to vector<2x1xf32>
    %480 = vector.broadcast %479 : vector<2x1xf32> to vector<2x256xf32>
    %481 = arith.mulf %476, %480 : vector<2x256xf32>
    %482 = vector.broadcast %477 : vector<1x256xf32> to vector<2x256xf32>
    %483 = arith.mulf %481, %482 : vector<2x256xf32>
    %484 = arith.addf %475, %483 : vector<2x256xf32>
    %485 = vector.extract_strided_slice %484 {offsets = [0, 0], sizes = [1, 256], strides = [1, 1]} : vector<2x256xf32> to vector<1x256xf32>
    %486 = vector.extract_strided_slice %484 {offsets = [1, 0], sizes = [1, 256], strides = [1, 1]} : vector<2x256xf32> to vector<1x256xf32>
    %487 = arith.addf %485, %486 : vector<1x256xf32>
    %488 = arith.negf %487 : vector<1x256xf32>
    %489 = math.exp %488 : vector<1x256xf32>
    %cst_274 = arith.constant 1.000000e+00 : f32
    %490 = vector.broadcast %cst_274 : f32 to vector<1x256xf32>
    %491 = arith.addf %490, %489 : vector<1x256xf32>
    %492 = arith.divf %490, %491 : vector<1x256xf32>
    %493 = arith.mulf %492, %487 : vector<1x256xf32>
    %c0_275 = arith.constant 0 : index
    %c0_276 = arith.constant 0 : index
    %c0_277 = arith.constant 0 : index
    %494 = vector.load %arg4[%c0_275, %c0_276, %c0_277] : memref<1x1x256xf32, #tpu.memory_space<vmem>>, vector<1x1x256xf32>
    %495 = vector.shape_cast %494 : vector<1x1x256xf32> to vector<1x256xf32>
    %496 = vector.shape_cast %493 : vector<1x256xf32> to vector<1x1x256xf32>
    tpu.vector_store %arg4[%c0_275, %c0_276, %c0_277], %496 {strides = array<i32>} : memref<1x1x256xf32, #tpu.memory_space<vmem>>, vector<1x1x256xf32>,
    return
  }
  func.func @transform_0(%arg0: i32) -> (i32, i32, i32) {
    %c0_i32 = arith.constant 0 : i32
    %c0_i32_0 = arith.constant 0 : i32
    %c0_i32_1 = arith.constant 0 : i32
    return %arg0, %c0_i32, %c0_i32_0 : i32, i32, i32
  }
  func.func @transform_1(%arg0: i32) -> (i32, i32) {
    %c0_i32 = arith.constant 0 : i32
    %c0_i32_0 = arith.constant 0 : i32
    %c0_i32_1 = arith.constant 0 : i32
    return %c0_i32, %c0_i32_0 : i32, i32
  }
  func.func @transform_2(%arg0: i32) -> (i32, i32, i32) {
    %c0_i32 = arith.constant 0 : i32
    %c0_i32_0 = arith.constant 0 : i32
    %c0_i32_1 = arith.constant 0 : i32
    %c0_i32_2 = arith.constant 0 : i32
    return %c0_i32, %c0_i32_0, %c0_i32_1 : i32, i32, i32
  }
  func.func @transform_3(%arg0: i32) -> (i32, i32, i32) {
    %c0_i32 = arith.constant 0 : i32
    %c0_i32_0 = arith.constant 0 : i32
    %c0_i32_1 = arith.constant 0 : i32
    return %arg0, %c0_i32, %c0_i32_0 : i32, i32, i32
  }
}

</mosaic_0001>

<llo_original>
// kernel: tpu_custom_call.1
$region0: #{tpu_custom_call.1}
  #allocation0 [shape = 'u32[]', space=smem, size = 0x4, offset = 0x4, fixed_abs, tag = 'smem constant byte address 0x4 - core index']
  #allocation1 [shape = 'u32[72,128]{1,0:T(1,128)}', space=vmem, size = 0x9000, scoped, tag = 'internal scratch']
  %s0 = inlined_call_operand.vmem [shape: f32[2,4,256], index: 0, kind: input, shape index: {}]
  %s1 = inlined_call_operand.vmem [shape: f32[14,256], index: 1, kind: input, shape index: {}]
  %s2 = inlined_call_operand.vmem [shape: f32[49,2,1], index: 2, kind: input, shape index: {}]
  %s3 = inlined_call_operand.hbm [shape: f32[2,1,256], index: 3, kind: output, shape index: {}]
  %s4 = sld [smem:[#allocation0]]
  $region45: #{tpu_custom_call.1} parent=0
    _
  %s6 = ssub.s32 1, %s4
  %s7 = scalar_select 0, %s6, %s4
  $region1: #{tpu_custom_call.1} parent=0
    #allocation2 [shape = 'u8[2048]{0}', space=vmem, size = 0x800, scoped, tag = 'output window, operand 0']
    #allocation3 [shape = 's32[2]{0}', space=sflag, size = 0x8, scoped, tag = 'scoped memory for tpu_custom_call.1']
    %8 = vsyncpa [#allocation3], 0
    %s9 = scalar_lea.sflag [#allocation3], 1
    %10 = vsyncpa %s9, 0
    loop: start=0, step=1, limit=4
    $region2: #{tpu_custom_call.1} parent=1 // loop_pre_header
      _
    $region3: #{tpu_custom_call.1} parent=1 // loop_header
      %s12 = sphi 0, %s16
      %p13 = scmp.ge.s32.totalorder %s12, 4
      %s22 = sphi 0, %s24
      %s25 = sphi 0, %s22
      %s26 = sphi 0, %s25
      %s42 = sphi 0, %s26
      %s46 = sphi 0, %s46
      %s48 = sphi 0, %s46
      %s49 = sphi 0, %s48
      %s63 = sphi 0, %s49
      %s67 = sphi 0, %s67
      %s69 = sphi 0, %s67
      %s70 = sphi 0, %s69
      %s84 = sphi 0, %s70
      %s90 = sphi 0, %s92
      %s93 = sphi 0, %s90
      %s94 = sphi 0, %s93
      %s110 = sphi 0, %s94
    $region4: #{tpu_custom_call.1} parent=1 // loop_header_branch
      %15 = sbr.rel (%p13) target = $region8
    $region5: #{tpu_custom_call.1} parent=1 // loop_body
      %s17 = ssub.s32 %s12, 1
      %s18 = ssub.s32 %s12, 2
      %s19 = sadd.s32 %s12, 1
      %s20 = ssub.s32 %s12, %s19
      %p21 = scmp.eq.s32.totalorder %s20, 0
      %s23 = sadd.s32 %s22, 1
      %s24 = scalar_select %p21, %s22, %s23
      %p27 = pneg %p21
      %p28 = scmp.eq.s32.totalorder %s12, 1
      %p29 = por %p27, %p28
      %p30 = scmp.ne.s32.totalorder %s22, %s25
      %p31 = scmp.eq.s32.totalorder %s12, 0
      %p32 = por %p30, %p31
      %p33 = scmp.ne.s32.totalorder %s22, %s25
      %p34 = scmp.eq.s32.totalorder %s17, 1
      %p35 = por %p33, %p34
      %p36 = scmp.ne.s32.totalorder %s25, %s26
      %p37 = scmp.eq.s32.totalorder %s17, 0
      %p38 = por %p36, %p37
      %p39 = scmp.ne.s32.totalorder %s25, %s26
      %p40 = scmp.eq.s32.totalorder %s18, 1
      %p41 = por %p39, %p40
      %p43 = scmp.ne.s32.totalorder %s26, %s42
      %p44 = scmp.eq.s32.totalorder %s18, 0
      %p45 = por %p43, %p44
      %s47 = sadd.s32 %s46, 1
      %p50 = scmp.eq.s32.totalorder %s12, 1
      %p51 = scmp.ne.s32.totalorder %s46, %s48
      %p52 = scmp.eq.s32.totalorder %s12, 0
      %p53 = por %p51, %p52
      %p54 = scmp.ne.s32.totalorder %s46, %s48
      %p55 = scmp.eq.s32.totalorder %s17, 1
      %p56 = por %p54, %p55
      %p57 = scmp.ne.s32.totalorder %s48, %s49
      %p58 = scmp.eq.s32.totalorder %s17, 0
      %p59 = por %p57, %p58
      %p60 = scmp.ne.s32.totalorder %s48, %s49
      %p61 = scmp.eq.s32.totalorder %s18, 1
      %p62 = por %p60, %p61
      %p64 = scmp.ne.s32.totalorder %s49, %s63
      %p65 = scmp.eq.s32.totalorder %s18, 0
      %p66 = por %p64, %p65
      %s68 = sadd.s32 %s67, 1
      %p71 = scmp.eq.s32.totalorder %s12, 1
      %p72 = scmp.ne.s32.totalorder %s67, %s69
      %p73 = scmp.eq.s32.totalorder %s12, 0
      %p74 = por %p72, %p73
      %p75 = scmp.ne.s32.totalorder %s67, %s69
      %p76 = scmp.eq.s32.totalorder %s17, 1
      %p77 = por %p75, %p76
      %p78 = scmp.ne.s32.totalorder %s69, %s70
      %p79 = scmp.eq.s32.totalorder %s17, 0
      %p80 = por %p78, %p79
      %p81 = scmp.ne.s32.totalorder %s69, %s70
      %p82 = scmp.eq.s32.totalorder %s18, 1
      %p83 = por %p81, %p82
      %p85 = scmp.ne.s32.totalorder %s70, %s84
      %p86 = scmp.eq.s32.totalorder %s18, 0
      %p87 = por %p85, %p86
      %s88 = ssub.s32 %s12, %s19
      %p89 = scmp.eq.s32.totalorder %s88, 0
      %s91 = sadd.s32 %s90, 1
      %s92 = scalar_select %p89, %s90, %s91
      %p95 = pneg %p89
      %p96 = scmp.eq.s32.totalorder %s12, 1
      %p97 = por %p95, %p96
      %p98 = scmp.ne.s32.totalorder %s90, %s93
      %p99 = scmp.eq.s32.totalorder %s12, 0
      %p100 = por %p98, %p99
      %p101 = scmp.ne.s32.totalorder %s90, %s93
      %p102 = scmp.eq.s32.totalorder %s17, 1
      %p103 = por %p101, %p102
      %p104 = scmp.ne.s32.totalorder %s93, %s94
      %p105 = scmp.eq.s32.totalorder %s17, 0
      %p106 = por %p104, %p105
      %p107 = scmp.ne.s32.totalorder %s93, %s94
      %p108 = scmp.eq.s32.totalorder %s18, 1
      %p109 = por %p107, %p108
      %p111 = scmp.ne.s32.totalorder %s94, %s110
      %p112 = scmp.eq.s32.totalorder %s18, 0
      %p113 = por %p111, %p112
      %p114 = scmp.le.s32.totalorder 1, %s12
      %p115 = scmp.lt.s32.totalorder %s12, 3
      %p116 = pnand %p114, %p115
      %p117 = pneg %p116
      // Predicated region
      $region9: #{tpu_custom_call.1} parent=5 // pred_check
        _
      $region10: #{tpu_custom_call.1} parent=5 // pred_check_branch
        %119 = sbr.rel (%p116) target = $region12
      $region11: #{tpu_custom_call.1} parent=5 // pred_region
        %s120 = ssub.s32 %s12, 1
        // Predicated region
        $region13: #{tpu_custom_call.1} parent=11 // pred_check
          %p121 = pneg %p59
        $region14: #{tpu_custom_call.1} parent=11 // pred_check_branch
          %123 = sbr.rel (%p121) target = $region16
        $region15: #{tpu_custom_call.1} parent=11 // pred_region
          _
        $region16: #{tpu_custom_call.1} parent=11 // pred_fallthru
          _
        // Predicated region
        $region17: #{tpu_custom_call.1} parent=11 // pred_check
          %p124 = pneg %p80
        $region18: #{tpu_custom_call.1} parent=11 // pred_check_branch
          %126 = sbr.rel (%p124) target = $region20
        $region19: #{tpu_custom_call.1} parent=11 // pred_region
          _
        $region20: #{tpu_custom_call.1} parent=11 // pred_fallthru
          _
      $region12: #{tpu_custom_call.1} parent=5 // pred_fallthru
        _
      %p127 = scmp.lt.s32.totalorder %s12, 2
      // Predicated region
      $region21: #{tpu_custom_call.1} parent=5 // pred_check
        %p128 = pneg %p127
      $region22: #{tpu_custom_call.1} parent=5 // pred_check_branch
        %130 = sbr.rel (%p128) target = $region24
      $region23: #{tpu_custom_call.1} parent=5 // pred_region
        // Predicated region
        $region25: #{tpu_custom_call.1} parent=23 // pred_check
          %p131 = pneg %p32
        $region26: #{tpu_custom_call.1} parent=23 // pred_check_branch
          %133 = sbr.rel (%p131) target = $region28
        $region27: #{tpu_custom_call.1} parent=23 // pred_region
          %p134 = scmp.lt.s32.totalorder %s12, 1
          %s135 = scalar_select %p134, %s12, 1
          %s136 = smul.addr %s135, 2
          %s137 = smul.addr %s136, 4
          %s138 = scalar_lea.vmem %s0, %s137
        $region28: #{tpu_custom_call.1} parent=23 // pred_fallthru
          _
      $region24: #{tpu_custom_call.1} parent=5 // pred_fallthru
        _
      %p139 = scmp.le.s32.totalorder 1, %s12
      %p140 = scmp.lt.s32.totalorder %s12, 3
      %p141 = pnand %p139, %p140
      %p142 = pneg %p141
      // Predicated region
      $region29: #{tpu_custom_call.1} parent=5 // pred_check
        _
      $region30: #{tpu_custom_call.1} parent=5 // pred_check_branch
        %144 = sbr.rel (%p141) target = $region32
      $region31: #{tpu_custom_call.1} parent=5 // pred_region
        %s145 = ssub.s32 %s12, 1
        %p146 = scmp.lt.s32.totalorder %s17, 1
        %s147 = scalar_select %p146, %s17, 1
        %s148 = smul.addr %s147, 2
        %s149 = smul.addr %s148, 4
        %s150 = scalar_lea.vmem %s0, %s149
        %p151 = pneg %p38
        %p152 = pneg %p35
        %p153 = pneg %p59
        %p154 = pneg %p56
        %p155 = pneg %p80
        %p156 = pneg %p77
        %p157 = pneg %p106
        %p158 = pneg %p103
        %s159 = sand.u32 %s93, 1
        %s160 = scalar_lea.sflag [#allocation3], %s159
        %s161 = sand.u32 %s93, 1
        %s162 = smul.addr %s161, 2
        %s163 = scalar_lea.vmem [#allocation2], %s162
        %p164 = scmp.lt.s32.totalorder %s17, 1
        %s165 = scalar_select %p164, %s17, 1
        %s166 = smul.addr %s165, 2
        %s167 = smul.addr %s166, 4
        %s168 = scalar_lea.vmem %s0, %s167
        %v169 = vld [vmem:[%s168] ss:$4 sm:$0x3]
        %s170 = scalar_lea.vmem %s168, 1
        %v171 = vld [vmem:[%s170] ss:$4 sm:$0x3]
        %v172 = vmax.f32 %v169, %v171
        %v173 = vadd.f32 %v169, %v171
        %s174 = scalar_lea.vmem %s168, 2
        %v175 = vld [vmem:[%s174] ss:$4 sm:$0x3]
        %v176 = vmax.f32 %v172, %v175
        %v177 = vadd.f32 %v173, %v175
        %s178 = scalar_lea.vmem %s168, 3
        %v179 = vld [vmem:[%s178] ss:$4 sm:$0x3]
        %v180 = vmax.f32 %v176, %v179
        %v181 = vadd.f32 %v177, %v179
        %v183 = vperm.slane %v180, 0
        %v184 = vperm.slane %v180, 1
        %v188 = vperm.slane %v181, 0
        %v189 = vperm.slane %v181, 1
        %vm192 = vcmask 1040384
        %v193 = vsel %vm192, %v183, %v188
        %v194 = vsel %vm192, %v184, %v189
        %195 = vrot.lane.b32.xlu0 %v193, 48
        %v196 = vpop.permute.xlu0 %195
        %197 = vrot.lane.b32.xlu0 %v194, 48
        %v198 = vpop.permute.xlu0 %197
        %v199 = vlaneseq
        %v200 = vand.u32 %v199, 127
        %vm201 = vcmp.lt.s32.totalorder %v200, 48
        %v202 = vsel %vm201, %v196, %v198
        %v203 = vsel %vm201, %v198, %v196
        %v204 = vld [vmem:[%s1] ss:$8 sm:$0x3]
        %v206 = vperm.slane %v204, 0
        %v207 = vperm.slane %v204, 1
        %v210 = vmul.f32 %v203, %v206
        %v211 = vmul.f32 %v202, %v207
        %212 = vrot.lane.b32.xlu0 %v210, 3
        %v213 = vpop.permute.xlu0 %212
        %214 = vrot.lane.b32.xlu0 %v211, 3
        %v215 = vpop.permute.xlu0 %214
        %vm216 = vcmp.lt.s32.totalorder %v200, 3
        %v217 = vsel %vm216, %v213, %v215
        %v218 = vsel %vm216, %v215, %v213
        %s219 = scalar_lea.vmem %s1, 7
        %v220 = vld [vmem:[%s219] ss:$8 sm:$0x3]
        %v221 = vld [vmem:[%s2] sm:$0x3]
        %223 = vset.pattern.permute.xlu0 0
        %224 = vperm.xlu0 %223, %v221
        %v225 = vpop.permute.xlu0 %224
        %v227 = vmul.f32 %v218, %v225
        %v228 = vmul.f32 %v217, %v225
        %v230 = vperm.slane %v220, 0
        %v231 = vperm.slane %v220, 1
        %v234 = vmul.f32 %v227, %v230
        %v235 = vmul.f32 %v228, %v231
        %v236 = vadd.f32 %v234, 0.0
        %v237 = vadd.f32 %v235, 0.0
        %238 = vrot.lane.b32.xlu0 %v218, 127
        %v239 = vpop.permute.xlu0 %238
        %240 = vrot.lane.b32.xlu0 %v217, 127
        %v241 = vpop.permute.xlu0 %240
        %vm242 = vcmp.lt.s32.totalorder %v200, 127
        %v243 = vsel %vm242, %v239, %v241
        %v244 = vsel %vm242, %v241, %v239
        %s245 = scalar_lea.vmem %s1, 16
        %v246 = vld [vmem:[%s245] ss:$8 sm:$0x3]
        %s247 = scalar_lea.vmem %s2, 2
        %v248 = vld [vmem:[%s247] sm:$0x3]
        %250 = vset.pattern.permute.xlu0 0
        %251 = vperm.xlu0 %250, %v248
        %v252 = vpop.permute.xlu0 %251
        %v254 = vmul.f32 %v243, %v252
        %v255 = vmul.f32 %v244, %v252
        %v257 = vperm.slane %v246, 0
        %v258 = vperm.slane %v246, 1
        %v261 = vmul.f32 %v254, %v257
        %v262 = vmul.f32 %v255, %v258
        %v263 = vadd.f32 %v236, %v261
        %v264 = vadd.f32 %v237, %v262
        %265 = vrot.lane.b32.xlu0 %v243, 127
        %v266 = vpop.permute.xlu0 %265
        %267 = vrot.lane.b32.xlu0 %v244, 127
        %v268 = vpop.permute.xlu0 %267
        %v269 = vsel %vm242, %v266, %v268
        %v270 = vsel %vm242, %v268, %v266
        %s271 = scalar_lea.vmem %s1, 17
        %v272 = vld [vmem:[%s271] ss:$8 sm:$0x3]
        %s273 = scalar_lea.vmem %s2, 4
        %v274 = vld [vmem:[%s273] sm:$0x3]
        %276 = vset.pattern.permute.xlu0 0
        %277 = vperm.xlu0 %276, %v274
        %v278 = vpop.permute.xlu0 %277
        %v280 = vmul.f32 %v269, %v278
        %v281 = vmul.f32 %v270, %v278
        %v283 = vperm.slane %v272, 0
        %v284 = vperm.slane %v272, 1
        %v287 = vmul.f32 %v280, %v283
        %v288 = vmul.f32 %v281, %v284
        %v289 = vadd.f32 %v263, %v287
        %v290 = vadd.f32 %v264, %v288
        %291 = vrot.lane.b32.xlu0 %v269, 127
        %v292 = vpop.permute.xlu0 %291
        %293 = vrot.lane.b32.xlu0 %v270, 127
        %v294 = vpop.permute.xlu0 %293
        %v295 = vsel %vm242, %v292, %v294
        %v296 = vsel %vm242, %v294, %v292
        %s297 = scalar_lea.vmem %s1, 18
        %v298 = vld [vmem:[%s297] ss:$8 sm:$0x3]
        %s299 = scalar_lea.vmem %s2, 6
        %v300 = vld [vmem:[%s299] sm:$0x3]
        %302 = vset.pattern.permute.xlu0 0
        %303 = vperm.xlu0 %302, %v300
        %v304 = vpop.permute.xlu0 %303
        %v306 = vmul.f32 %v295, %v304
        %v307 = vmul.f32 %v296, %v304
        %v309 = vperm.slane %v298, 0
        %v310 = vperm.slane %v298, 1
        %v313 = vmul.f32 %v306, %v309
        %v314 = vmul.f32 %v307, %v310
        %v315 = vadd.f32 %v289, %v313
        %v316 = vadd.f32 %v290, %v314
        %317 = vrot.lane.b32.xlu0 %v295, 127
        %v318 = vpop.permute.xlu0 %317
        %319 = vrot.lane.b32.xlu0 %v296, 127
        %v320 = vpop.permute.xlu0 %319
        %v321 = vsel %vm242, %v318, %v320
        %v322 = vsel %vm242, %v320, %v318
        %s323 = scalar_lea.vmem %s1, 19
        %v324 = vld [vmem:[%s323] ss:$8 sm:$0x3]
        %s325 = scalar_lea.vmem %s2, 8
        %v326 = vld [vmem:[%s325] sm:$0x3]
        %328 = vset.pattern.permute.xlu0 0
        %329 = vperm.xlu0 %328, %v326
        %v330 = vpop.permute.xlu0 %329
        %v332 = vmul.f32 %v321, %v330
        %v333 = vmul.f32 %v322, %v330
        %v335 = vperm.slane %v324, 0
        %v336 = vperm.slane %v324, 1
        %v339 = vmul.f32 %v332, %v335
        %v340 = vmul.f32 %v333, %v336
        %v341 = vadd.f32 %v315, %v339
        %v342 = vadd.f32 %v316, %v340
        %343 = vrot.lane.b32.xlu0 %v321, 127
        %v344 = vpop.permute.xlu0 %343
        %345 = vrot.lane.b32.xlu0 %v322, 127
        %v346 = vpop.permute.xlu0 %345
        %v347 = vsel %vm242, %v344, %v346
        %v348 = vsel %vm242, %v346, %v344
        %s349 = scalar_lea.vmem %s1, 20
        %v350 = vld [vmem:[%s349] ss:$8 sm:$0x3]
        %s351 = scalar_lea.vmem %s2, 10
        %v352 = vld [vmem:[%s351] sm:$0x3]
        %354 = vset.pattern.permute.xlu0 0
        %355 = vperm.xlu0 %354, %v352
        %v356 = vpop.permute.xlu0 %355
        %v358 = vmul.f32 %v347, %v356
        %v359 = vmul.f32 %v348, %v356
        %v361 = vperm.slane %v350, 0
        %v362 = vperm.slane %v350, 1
        %v365 = vmul.f32 %v358, %v361
        %v366 = vmul.f32 %v359, %v362
        %v367 = vadd.f32 %v341, %v365
        %v368 = vadd.f32 %v342, %v366
        %369 = vrot.lane.b32.xlu0 %v347, 127
        %v370 = vpop.permute.xlu0 %369
        %371 = vrot.lane.b32.xlu0 %v348, 127
        %v372 = vpop.permute.xlu0 %371
        %v373 = vsel %vm242, %v370, %v372
        %v374 = vsel %vm242, %v372, %v370
        %s375 = scalar_lea.vmem %s1, 21
        %v376 = vld [vmem:[%s375] ss:$8 sm:$0x3]
        %s377 = scalar_lea.vmem %s2, 12
        %v378 = vld [vmem:[%s377] sm:$0x3]
        %380 = vset.pattern.permute.xlu0 0
        %381 = vperm.xlu0 %380, %v378
        %v382 = vpop.permute.xlu0 %381
        %v384 = vmul.f32 %v373, %v382
        %v385 = vmul.f32 %v374, %v382
        %v387 = vperm.slane %v376, 0
        %v388 = vperm.slane %v376, 1
        %v391 = vmul.f32 %v384, %v387
        %v392 = vmul.f32 %v385, %v388
        %v393 = vadd.f32 %v367, %v391
        %v394 = vadd.f32 %v368, %v392
        %395 = vrot.lane.b32.xlu0 %v203, 112
        %v396 = vpop.permute.xlu0 %395
        %397 = vrot.lane.b32.xlu0 %v202, 112
        %v398 = vpop.permute.xlu0 %397
        %vm399 = vcmp.lt.s32.totalorder %v200, 112
        %v400 = vsel %vm399, %v396, %v398
        %v401 = vsel %vm399, %v398, %v396
        %s402 = scalar_lea.vmem %s1, 1
        %v403 = vld [vmem:[%s402] ss:$8 sm:$0x3]
        %v405 = vperm.slane %v403, 0
        %v406 = vperm.slane %v403, 1
        %v409 = vmul.f32 %v400, %v405
        %v410 = vmul.f32 %v401, %v406
        %411 = vrot.lane.b32.xlu0 %v409, 3
        %v412 = vpop.permute.xlu0 %411
        %413 = vrot.lane.b32.xlu0 %v410, 3
        %v414 = vpop.permute.xlu0 %413
        %v415 = vsel %vm216, %v412, %v414
        %v416 = vsel %vm216, %v414, %v412
        %s417 = scalar_lea.vmem %s2, 14
        %v418 = vld [vmem:[%s417] sm:$0x3]
        %420 = vset.pattern.permute.xlu0 0
        %421 = vperm.xlu0 %420, %v418
        %v422 = vpop.permute.xlu0 %421
        %v424 = vmul.f32 %v416, %v422
        %v425 = vmul.f32 %v415, %v422
        %v426 = vmul.f32 %v424, %v230
        %v427 = vmul.f32 %v425, %v231
        %v428 = vadd.f32 %v393, %v426
        %v429 = vadd.f32 %v394, %v427
        %430 = vrot.lane.b32.xlu0 %v416, 127
        %v431 = vpop.permute.xlu0 %430
        %432 = vrot.lane.b32.xlu0 %v415, 127
        %v433 = vpop.permute.xlu0 %432
        %v434 = vsel %vm242, %v431, %v433
        %v435 = vsel %vm242, %v433, %v431
        %s436 = scalar_lea.vmem %s2, 16
        %v437 = vld [vmem:[%s436] sm:$0x3]
        %439 = vset.pattern.permute.xlu0 0
        %440 = vperm.xlu0 %439, %v437
        %v441 = vpop.permute.xlu0 %440
        %v443 = vmul.f32 %v434, %v441
        %v444 = vmul.f32 %v435, %v441
        %v445 = vmul.f32 %v443, %v257
        %v446 = vmul.f32 %v444, %v258
        %v447 = vadd.f32 %v428, %v445
        %v448 = vadd.f32 %v429, %v446
        %449 = vrot.lane.b32.xlu0 %v434, 127
        %v450 = vpop.permute.xlu0 %449
        %451 = vrot.lane.b32.xlu0 %v435, 127
        %v452 = vpop.permute.xlu0 %451
        %v453 = vsel %vm242, %v450, %v452
        %v454 = vsel %vm242, %v452, %v450
        %s455 = scalar_lea.vmem %s2, 18
        %v456 = vld [vmem:[%s455] sm:$0x3]
        %458 = vset.pattern.permute.xlu0 0
        %459 = vperm.xlu0 %458, %v456
        %v460 = vpop.permute.xlu0 %459
        %v462 = vmul.f32 %v453, %v460
        %v463 = vmul.f32 %v454, %v460
        %v464 = vmul.f32 %v462, %v283
        %v465 = vmul.f32 %v463, %v284
        %v466 = vadd.f32 %v447, %v464
        %v467 = vadd.f32 %v448, %v465
        %468 = vrot.lane.b32.xlu0 %v453, 127
        %v469 = vpop.permute.xlu0 %468
        %470 = vrot.lane.b32.xlu0 %v454, 127
        %v471 = vpop.permute.xlu0 %470
        %v472 = vsel %vm242, %v469, %v471
        %v473 = vsel %vm242, %v471, %v469
        %s474 = scalar_lea.vmem %s2, 20
        %v475 = vld [vmem:[%s474] sm:$0x3]
        %477 = vset.pattern.permute.xlu0 0
        %478 = vperm.xlu0 %477, %v475
        %v479 = vpop.permute.xlu0 %478
        %v481 = vmul.f32 %v472, %v479
        %v482 = vmul.f32 %v473, %v479
        %v483 = vmul.f32 %v481, %v309
        %v484 = vmul.f32 %v482, %v310
        %v485 = vadd.f32 %v466, %v483
        %v486 = vadd.f32 %v467, %v484
        %487 = vrot.lane.b32.xlu0 %v472, 127
        %v488 = vpop.permute.xlu0 %487
        %489 = vrot.lane.b32.xlu0 %v473, 127
        %v490 = vpop.permute.xlu0 %489
        %v491 = vsel %vm242, %v488, %v490
        %v492 = vsel %vm242, %v490, %v488
        %s493 = scalar_lea.vmem %s2, 22
        %v494 = vld [vmem:[%s493] sm:$0x3]
        %496 = vset.pattern.permute.xlu0 0
        %497 = vperm.xlu0 %496, %v494
        %v498 = vpop.permute.xlu0 %497
        %v500 = vmul.f32 %v491, %v498
        %v501 = vmul.f32 %v492, %v498
        %v502 = vmul.f32 %v500, %v335
        %v503 = vmul.f32 %v501, %v336
        %v504 = vadd.f32 %v485, %v502
        %v505 = vadd.f32 %v486, %v503
        %506 = vrot.lane.b32.xlu0 %v491, 127
        %v507 = vpop.permute.xlu0 %506
        %508 = vrot.lane.b32.xlu0 %v492, 127
        %v509 = vpop.permute.xlu0 %508
        %v510 = vsel %vm242, %v507, %v509
        %v511 = vsel %vm242, %v509, %v507
        %s512 = scalar_lea.vmem %s2, 24
        %v513 = vld [vmem:[%s512] sm:$0x3]
        %515 = vset.pattern.permute.xlu0 0
        %516 = vperm.xlu0 %515, %v513
        %v517 = vpop.permute.xlu0 %516
        %v519 = vmul.f32 %v510, %v517
        %v520 = vmul.f32 %v511, %v517
        %v521 = vmul.f32 %v519, %v361
        %v522 = vmul.f32 %v520, %v362
        %v523 = vadd.f32 %v504, %v521
        %v524 = vadd.f32 %v505, %v522
        %525 = vrot.lane.b32.xlu0 %v510, 127
        %v526 = vpop.permute.xlu0 %525
        %527 = vrot.lane.b32.xlu0 %v511, 127
        %v528 = vpop.permute.xlu0 %527
        %v529 = vsel %vm242, %v526, %v528
        %v530 = vsel %vm242, %v528, %v526
        %s531 = scalar_lea.vmem %s2, 26
        %v532 = vld [vmem:[%s531] sm:$0x3]
        %534 = vset.pattern.permute.xlu0 0
        %535 = vperm.xlu0 %534, %v532
        %v536 = vpop.permute.xlu0 %535
        %v538 = vmul.f32 %v529, %v536
        %v539 = vmul.f32 %v530, %v536
        %v540 = vmul.f32 %v538, %v387
        %v541 = vmul.f32 %v539, %v388
        %v542 = vadd.f32 %v523, %v540
        %v543 = vadd.f32 %v524, %v541
        %544 = vrot.lane.b32.xlu0 %v400, 112
        %v545 = vpop.permute.xlu0 %544
        %546 = vrot.lane.b32.xlu0 %v401, 112
        %v547 = vpop.permute.xlu0 %546
        %v548 = vsel %vm399, %v545, %v547
        %v549 = vsel %vm399, %v547, %v545
        %s550 = scalar_lea.vmem %s1, 2
        %v551 = vld [vmem:[%s550] ss:$8 sm:$0x3]
        %v553 = vperm.slane %v551, 0
        %v554 = vperm.slane %v551, 1
        %v557 = vmul.f32 %v548, %v553
        %v558 = vmul.f32 %v549, %v554
        %559 = vrot.lane.b32.xlu0 %v557, 3
        %v560 = vpop.permute.xlu0 %559
        %561 = vrot.lane.b32.xlu0 %v558, 3
        %v562 = vpop.permute.xlu0 %561
        %v563 = vsel %vm216, %v560, %v562
        %v564 = vsel %vm216, %v562, %v560
        %s565 = scalar_lea.vmem %s2, 28
        %v566 = vld [vmem:[%s565] sm:$0x3]
        %568 = vset.pattern.permute.xlu0 0
        %569 = vperm.xlu0 %568, %v566
        %v570 = vpop.permute.xlu0 %569
        %v572 = vmul.f32 %v564, %v570
        %v573 = vmul.f32 %v563, %v570
        %v574 = vmul.f32 %v572, %v230
        %v575 = vmul.f32 %v573, %v231
        %v576 = vadd.f32 %v542, %v574
        %v577 = vadd.f32 %v543, %v575
        %578 = vrot.lane.b32.xlu0 %v564, 127
        %v579 = vpop.permute.xlu0 %578
        %580 = vrot.lane.b32.xlu0 %v563, 127
        %v581 = vpop.permute.xlu0 %580
        %v582 = vsel %vm242, %v579, %v581
        %v583 = vsel %vm242, %v581, %v579
        %s584 = scalar_lea.vmem %s2, 30
        %v585 = vld [vmem:[%s584] sm:$0x3]
        %587 = vset.pattern.permute.xlu0 0
        %588 = vperm.xlu0 %587, %v585
        %v589 = vpop.permute.xlu0 %588
        %v591 = vmul.f32 %v582, %v589
        %v592 = vmul.f32 %v583, %v589
        %v593 = vmul.f32 %v591, %v257
        %v594 = vmul.f32 %v592, %v258
        %v595 = vadd.f32 %v576, %v593
        %v596 = vadd.f32 %v577, %v594
        %597 = vrot.lane.b32.xlu0 %v582, 127
        %v598 = vpop.permute.xlu0 %597
        %599 = vrot.lane.b32.xlu0 %v583, 127
        %v600 = vpop.permute.xlu0 %599
        %v601 = vsel %vm242, %v598, %v600
        %v602 = vsel %vm242, %v600, %v598
        %s603 = scalar_lea.vmem %s2, 32
        %v604 = vld [vmem:[%s603] sm:$0x3]
        %606 = vset.pattern.permute.xlu0 0
        %607 = vperm.xlu0 %606, %v604
        %v608 = vpop.permute.xlu0 %607
        %v610 = vmul.f32 %v601, %v608
        %v611 = vmul.f32 %v602, %v608
        %v612 = vmul.f32 %v610, %v283
        %v613 = vmul.f32 %v611, %v284
        %v614 = vadd.f32 %v595, %v612
        %v615 = vadd.f32 %v596, %v613
        %616 = vrot.lane.b32.xlu0 %v601, 127
        %v617 = vpop.permute.xlu0 %616
        %618 = vrot.lane.b32.xlu0 %v602, 127
        %v619 = vpop.permute.xlu0 %618
        %v620 = vsel %vm242, %v617, %v619
        %v621 = vsel %vm242, %v619, %v617
        %s622 = scalar_lea.vmem %s2, 34
        %v623 = vld [vmem:[%s622] sm:$0x3]
        %625 = vset.pattern.permute.xlu0 0
        %626 = vperm.xlu0 %625, %v623
        %v627 = vpop.permute.xlu0 %626
        %v629 = vmul.f32 %v620, %v627
        %v630 = vmul.f32 %v621, %v627
        %v631 = vmul.f32 %v629, %v309
        %v632 = vmul.f32 %v630, %v310
        %v633 = vadd.f32 %v614, %v631
        %v634 = vadd.f32 %v615, %v632
        %635 = vrot.lane.b32.xlu0 %v620, 127
        %v636 = vpop.permute.xlu0 %635
        %637 = vrot.lane.b32.xlu0 %v621, 127
        %v638 = vpop.permute.xlu0 %637
        %v639 = vsel %vm242, %v636, %v638
        %v640 = vsel %vm242, %v638, %v636
        %s641 = scalar_lea.vmem %s2, 36
        %v642 = vld [vmem:[%s641] sm:$0x3]
        %644 = vset.pattern.permute.xlu0 0
        %645 = vperm.xlu0 %644, %v642
        %v646 = vpop.permute.xlu0 %645
        %v648 = vmul.f32 %v639, %v646
        %v649 = vmul.f32 %v640, %v646
        %v650 = vmul.f32 %v648, %v335
        %v651 = vmul.f32 %v649, %v336
        %v652 = vadd.f32 %v633, %v650
        %v653 = vadd.f32 %v634, %v651
        %654 = vrot.lane.b32.xlu0 %v639, 127
        %v655 = vpop.permute.xlu0 %654
        %656 = vrot.lane.b32.xlu0 %v640, 127
        %v657 = vpop.permute.xlu0 %656
        %v658 = vsel %vm242, %v655, %v657
        %v659 = vsel %vm242, %v657, %v655
        %s660 = scalar_lea.vmem %s2, 38
        %v661 = vld [vmem:[%s660] sm:$0x3]
        %663 = vset.pattern.permute.xlu0 0
        %664 = vperm.xlu0 %663, %v661
        %v665 = vpop.permute.xlu0 %664
        %v667 = vmul.f32 %v658, %v665
        %v668 = vmul.f32 %v659, %v665
        %v669 = vmul.f32 %v667, %v361
        %v670 = vmul.f32 %v668, %v362
        %v671 = vadd.f32 %v652, %v669
        %v672 = vadd.f32 %v653, %v670
        %673 = vrot.lane.b32.xlu0 %v658, 127
        %v674 = vpop.permute.xlu0 %673
        %675 = vrot.lane.b32.xlu0 %v659, 127
        %v676 = vpop.permute.xlu0 %675
        %v677 = vsel %vm242, %v674, %v676
        %v678 = vsel %vm242, %v676, %v674
        %s679 = scalar_lea.vmem %s2, 40
        %v680 = vld [vmem:[%s679] sm:$0x3]
        %682 = vset.pattern.permute.xlu0 0
        %683 = vperm.xlu0 %682, %v680
        %v684 = vpop.permute.xlu0 %683
        %v686 = vmul.f32 %v677, %v684
        %v687 = vmul.f32 %v678, %v684
        %v688 = vmul.f32 %v686, %v387
        %v689 = vmul.f32 %v687, %v388
        %v690 = vadd.f32 %v671, %v688
        %v691 = vadd.f32 %v672, %v689
        %692 = vrot.lane.b32.xlu0 %v548, 112
        %v693 = vpop.permute.xlu0 %692
        %694 = vrot.lane.b32.xlu0 %v549, 112
        %v695 = vpop.permute.xlu0 %694
        %v696 = vsel %vm399, %v693, %v695
        %v697 = vsel %vm399, %v695, %v693
        %s698 = scalar_lea.vmem %s1, 3
        %v699 = vld [vmem:[%s698] ss:$8 sm:$0x3]
        %v701 = vperm.slane %v699, 0
        %v702 = vperm.slane %v699, 1
        %v705 = vmul.f32 %v696, %v701
        %v706 = vmul.f32 %v697, %v702
        %707 = vrot.lane.b32.xlu0 %v705, 3
        %v708 = vpop.permute.xlu0 %707
        %709 = vrot.lane.b32.xlu0 %v706, 3
        %v710 = vpop.permute.xlu0 %709
        %v711 = vsel %vm216, %v708, %v710
        %v712 = vsel %vm216, %v710, %v708
        %s713 = scalar_lea.vmem %s2, 42
        %v714 = vld [vmem:[%s713] sm:$0x3]
        %716 = vset.pattern.permute.xlu0 0
        %717 = vperm.xlu0 %716, %v714
        %v718 = vpop.permute.xlu0 %717
        %v720 = vmul.f32 %v712, %v718
        %v721 = vmul.f32 %v711, %v718
        %v722 = vmul.f32 %v720, %v230
        %v723 = vmul.f32 %v721, %v231
        %v724 = vadd.f32 %v690, %v722
        %v725 = vadd.f32 %v691, %v723
        %726 = vrot.lane.b32.xlu0 %v712, 127
        %v727 = vpop.permute.xlu0 %726
        %728 = vrot.lane.b32.xlu0 %v711, 127
        %v729 = vpop.permute.xlu0 %728
        %v730 = vsel %vm242, %v727, %v729
        %v731 = vsel %vm242, %v729, %v727
        %s732 = scalar_lea.vmem %s2, 44
        %v733 = vld [vmem:[%s732] sm:$0x3]
        %735 = vset.pattern.permute.xlu0 0
        %736 = vperm.xlu0 %735, %v733
        %v737 = vpop.permute.xlu0 %736
        %v739 = vmul.f32 %v730, %v737
        %v740 = vmul.f32 %v731, %v737
        %v741 = vmul.f32 %v739, %v257
        %v742 = vmul.f32 %v740, %v258
        %v743 = vadd.f32 %v724, %v741
        %v744 = vadd.f32 %v725, %v742
        %745 = vrot.lane.b32.xlu0 %v730, 127
        %v746 = vpop.permute.xlu0 %745
        %747 = vrot.lane.b32.xlu0 %v731, 127
        %v748 = vpop.permute.xlu0 %747
        %v749 = vsel %vm242, %v746, %v748
        %v750 = vsel %vm242, %v748, %v746
        %s751 = scalar_lea.vmem %s2, 46
        %v752 = vld [vmem:[%s751] sm:$0x3]
        %754 = vset.pattern.permute.xlu0 0
        %755 = vperm.xlu0 %754, %v752
        %v756 = vpop.permute.xlu0 %755
        %v758 = vmul.f32 %v749, %v756
        %v759 = vmul.f32 %v750, %v756
        %v760 = vmul.f32 %v758, %v283
        %v761 = vmul.f32 %v759, %v284
        %v762 = vadd.f32 %v743, %v760
        %v763 = vadd.f32 %v744, %v761
        %764 = vrot.lane.b32.xlu0 %v749, 127
        %v765 = vpop.permute.xlu0 %764
        %766 = vrot.lane.b32.xlu0 %v750, 127
        %v767 = vpop.permute.xlu0 %766
        %v768 = vsel %vm242, %v765, %v767
        %v769 = vsel %vm242, %v767, %v765
        %s770 = scalar_lea.vmem %s2, 48
        %v771 = vld [vmem:[%s770] sm:$0x3]
        %773 = vset.pattern.permute.xlu0 0
        %774 = vperm.xlu0 %773, %v771
        %v775 = vpop.permute.xlu0 %774
        %v777 = vmul.f32 %v768, %v775
        %v778 = vmul.f32 %v769, %v775
        %v779 = vmul.f32 %v777, %v309
        %v780 = vmul.f32 %v778, %v310
        %v781 = vadd.f32 %v762, %v779
        %v782 = vadd.f32 %v763, %v780
        %783 = vrot.lane.b32.xlu0 %v768, 127
        %v784 = vpop.permute.xlu0 %783
        %785 = vrot.lane.b32.xlu0 %v769, 127
        %v786 = vpop.permute.xlu0 %785
        %v787 = vsel %vm242, %v784, %v786
        %v788 = vsel %vm242, %v786, %v784
        %s789 = scalar_lea.vmem %s2, 50
        %v790 = vld [vmem:[%s789] sm:$0x3]
        %792 = vset.pattern.permute.xlu0 0
        %793 = vperm.xlu0 %792, %v790
        %v794 = vpop.permute.xlu0 %793
        %v796 = vmul.f32 %v787, %v794
        %v797 = vmul.f32 %v788, %v794
        %v798 = vmul.f32 %v796, %v335
        %v799 = vmul.f32 %v797, %v336
        %v800 = vadd.f32 %v781, %v798
        %v801 = vadd.f32 %v782, %v799
        %802 = vrot.lane.b32.xlu0 %v787, 127
        %v803 = vpop.permute.xlu0 %802
        %804 = vrot.lane.b32.xlu0 %v788, 127
        %v805 = vpop.permute.xlu0 %804
        %v806 = vsel %vm242, %v803, %v805
        %v807 = vsel %vm242, %v805, %v803
        %s808 = scalar_lea.vmem %s2, 52
        %v809 = vld [vmem:[%s808] sm:$0x3]
        %811 = vset.pattern.permute.xlu0 0
        %812 = vperm.xlu0 %811, %v809
        %v813 = vpop.permute.xlu0 %812
        %v815 = vmul.f32 %v806, %v813
        %v816 = vmul.f32 %v807, %v813
        %v817 = vmul.f32 %v815, %v361
        %v818 = vmul.f32 %v816, %v362
        %v819 = vadd.f32 %v800, %v817
        %v820 = vadd.f32 %v801, %v818
        %821 = vrot.lane.b32.xlu0 %v806, 127
        %v822 = vpop.permute.xlu0 %821
        %823 = vrot.lane.b32.xlu0 %v807, 127
        %v824 = vpop.permute.xlu0 %823
        %v825 = vsel %vm242, %v822, %v824
        %v826 = vsel %vm242, %v824, %v822
        %s827 = scalar_lea.vmem %s2, 54
        %v828 = vld [vmem:[%s827] sm:$0x3]
        %830 = vset.pattern.permute.xlu0 0
        %831 = vperm.xlu0 %830, %v828
        %v832 = vpop.permute.xlu0 %831
        %v834 = vmul.f32 %v825, %v832
        %v835 = vmul.f32 %v826, %v832
        %v836 = vmul.f32 %v834, %v387
        %v837 = vmul.f32 %v835, %v388
        %v838 = vadd.f32 %v819, %v836
        %v839 = vadd.f32 %v820, %v837
        %840 = vrot.lane.b32.xlu0 %v696, 112
        %v841 = vpop.permute.xlu0 %840
        %842 = vrot.lane.b32.xlu0 %v697, 112
        %v843 = vpop.permute.xlu0 %842
        %v844 = vsel %vm399, %v841, %v843
        %v845 = vsel %vm399, %v843, %v841
        %s846 = scalar_lea.vmem %s1, 4
        %v847 = vld [vmem:[%s846] ss:$8 sm:$0x3]
        %v849 = vperm.slane %v847, 0
        %v850 = vperm.slane %v847, 1
        %v853 = vmul.f32 %v844, %v849
        %v854 = vmul.f32 %v845, %v850
        %855 = vrot.lane.b32.xlu0 %v853, 3
        %v856 = vpop.permute.xlu0 %855
        %857 = vrot.lane.b32.xlu0 %v854, 3
        %v858 = vpop.permute.xlu0 %857
        %v859 = vsel %vm216, %v856, %v858
        %v860 = vsel %vm216, %v858, %v856
        %s861 = scalar_lea.vmem %s2, 56
        %v862 = vld [vmem:[%s861] sm:$0x3]
        %864 = vset.pattern.permute.xlu0 0
        %865 = vperm.xlu0 %864, %v862
        %v866 = vpop.permute.xlu0 %865
        %v868 = vmul.f32 %v860, %v866
        %v869 = vmul.f32 %v859, %v866
        %v870 = vmul.f32 %v868, %v230
        %v871 = vmul.f32 %v869, %v231
        %v872 = vadd.f32 %v838, %v870
        %v873 = vadd.f32 %v839, %v871
        %874 = vrot.lane.b32.xlu0 %v860, 127
        %v875 = vpop.permute.xlu0 %874
        %876 = vrot.lane.b32.xlu0 %v859, 127
        %v877 = vpop.permute.xlu0 %876
        %v878 = vsel %vm242, %v875, %v877
        %v879 = vsel %vm242, %v877, %v875
        %s880 = scalar_lea.vmem %s2, 58
        %v881 = vld [vmem:[%s880] sm:$0x3]
        %883 = vset.pattern.permute.xlu0 0
        %884 = vperm.xlu0 %883, %v881
        %v885 = vpop.permute.xlu0 %884
        %v887 = vmul.f32 %v878, %v885
        %v888 = vmul.f32 %v879, %v885
        %v889 = vmul.f32 %v887, %v257
        %v890 = vmul.f32 %v888, %v258
        %v891 = vadd.f32 %v872, %v889
        %v892 = vadd.f32 %v873, %v890
        %893 = vrot.lane.b32.xlu0 %v878, 127
        %v894 = vpop.permute.xlu0 %893
        %895 = vrot.lane.b32.xlu0 %v879, 127
        %v896 = vpop.permute.xlu0 %895
        %v897 = vsel %vm242, %v894, %v896
        %v898 = vsel %vm242, %v896, %v894
        %s899 = scalar_lea.vmem %s2, 60
        %v900 = vld [vmem:[%s899] sm:$0x3]
        %902 = vset.pattern.permute.xlu0 0
        %903 = vperm.xlu0 %902, %v900
        %v904 = vpop.permute.xlu0 %903
        %v906 = vmul.f32 %v897, %v904
        %v907 = vmul.f32 %v898, %v904
        %v908 = vmul.f32 %v906, %v283
        %v909 = vmul.f32 %v907, %v284
        %v910 = vadd.f32 %v891, %v908
        %v911 = vadd.f32 %v892, %v909
        %912 = vrot.lane.b32.xlu0 %v897, 127
        %v913 = vpop.permute.xlu0 %912
        %914 = vrot.lane.b32.xlu0 %v898, 127
        %v915 = vpop.permute.xlu0 %914
        %v916 = vsel %vm242, %v913, %v915
        %v917 = vsel %vm242, %v915, %v913
        %s918 = scalar_lea.vmem %s2, 62
        %v919 = vld [vmem:[%s918] sm:$0x3]
        %921 = vset.pattern.permute.xlu0 0
        %922 = vperm.xlu0 %921, %v919
        %v923 = vpop.permute.xlu0 %922
        %v925 = vmul.f32 %v916, %v923
        %v926 = vmul.f32 %v917, %v923
        %v927 = vmul.f32 %v925, %v309
        %v928 = vmul.f32 %v926, %v310
        %v929 = vadd.f32 %v910, %v927
        %v930 = vadd.f32 %v911, %v928
        %931 = vrot.lane.b32.xlu0 %v916, 127
        %v932 = vpop.permute.xlu0 %931
        %933 = vrot.lane.b32.xlu0 %v917, 127
        %v934 = vpop.permute.xlu0 %933
        %v935 = vsel %vm242, %v932, %v934
        %v936 = vsel %vm242, %v934, %v932
        %s937 = scalar_lea.vmem %s2, 64
        %v938 = vld [vmem:[%s937] sm:$0x3]
        %940 = vset.pattern.permute.xlu0 0
        %941 = vperm.xlu0 %940, %v938
        %v942 = vpop.permute.xlu0 %941
        %v944 = vmul.f32 %v935, %v942
        %v945 = vmul.f32 %v936, %v942
        %v946 = vmul.f32 %v944, %v335
        %v947 = vmul.f32 %v945, %v336
        %v948 = vadd.f32 %v929, %v946
        %v949 = vadd.f32 %v930, %v947
        %950 = vrot.lane.b32.xlu0 %v935, 127
        %v951 = vpop.permute.xlu0 %950
        %952 = vrot.lane.b32.xlu0 %v936, 127
        %v953 = vpop.permute.xlu0 %952
        %v954 = vsel %vm242, %v951, %v953
        %v955 = vsel %vm242, %v953, %v951
        %s956 = scalar_lea.vmem %s2, 66
        %v957 = vld [vmem:[%s956] sm:$0x3]
        %959 = vset.pattern.permute.xlu0 0
        %960 = vperm.xlu0 %959, %v957
        %v961 = vpop.permute.xlu0 %960
        %v963 = vmul.f32 %v954, %v961
        %v964 = vmul.f32 %v955, %v961
        %v965 = vmul.f32 %v963, %v361
        %v966 = vmul.f32 %v964, %v362
        %v967 = vadd.f32 %v948, %v965
        %v968 = vadd.f32 %v949, %v966
        %969 = vrot.lane.b32.xlu0 %v954, 127
        %v970 = vpop.permute.xlu0 %969
        %971 = vrot.lane.b32.xlu0 %v955, 127
        %v972 = vpop.permute.xlu0 %971
        %v973 = vsel %vm242, %v970, %v972
        %v974 = vsel %vm242, %v972, %v970
        %s975 = scalar_lea.vmem %s2, 68
        %v976 = vld [vmem:[%s975] sm:$0x3]
        %978 = vset.pattern.permute.xlu0 0
        %979 = vperm.xlu0 %978, %v976
        %v980 = vpop.permute.xlu0 %979
        %v982 = vmul.f32 %v973, %v980
        %v983 = vmul.f32 %v974, %v980
        %v984 = vmul.f32 %v982, %v387
        %v985 = vmul.f32 %v983, %v388
        %v986 = vadd.f32 %v967, %v984
        %v987 = vadd.f32 %v968, %v985
        %988 = vrot.lane.b32.xlu0 %v844, 112
        %v989 = vpop.permute.xlu0 %988
        %990 = vrot.lane.b32.xlu0 %v845, 112
        %v991 = vpop.permute.xlu0 %990
        %v992 = vsel %vm399, %v989, %v991
        %v993 = vsel %vm399, %v991, %v989
        %s994 = scalar_lea.vmem %s1, 5
        %v995 = vld [vmem:[%s994] ss:$8 sm:$0x3]
        %v997 = vperm.slane %v995, 0
        %v998 = vperm.slane %v995, 1
        %v1001 = vmul.f32 %v992, %v997
        %v1002 = vmul.f32 %v993, %v998
        %1003 = vrot.lane.b32.xlu0 %v1001, 3
        %v1004 = vpop.permute.xlu0 %1003
        %1005 = vrot.lane.b32.xlu0 %v1002, 3
        %v1006 = vpop.permute.xlu0 %1005
        %v1007 = vsel %vm216, %v1004, %v1006
        %v1008 = vsel %vm216, %v1006, %v1004
        %s1009 = scalar_lea.vmem %s2, 70
        %v1010 = vld [vmem:[%s1009] sm:$0x3]
        %1012 = vset.pattern.permute.xlu0 0
        %1013 = vperm.xlu0 %1012, %v1010
        %v1014 = vpop.permute.xlu0 %1013
        %v1016 = vmul.f32 %v1008, %v1014
        %v1017 = vmul.f32 %v1007, %v1014
        %v1018 = vmul.f32 %v1016, %v230
        %v1019 = vmul.f32 %v1017, %v231
        %v1020 = vadd.f32 %v986, %v1018
        %v1021 = vadd.f32 %v987, %v1019
        %1022 = vrot.lane.b32.xlu0 %v1008, 127
        %v1023 = vpop.permute.xlu0 %1022
        %1024 = vrot.lane.b32.xlu0 %v1007, 127
        %v1025 = vpop.permute.xlu0 %1024
        %v1026 = vsel %vm242, %v1023, %v1025
        %v1027 = vsel %vm242, %v1025, %v1023
        %s1028 = scalar_lea.vmem %s2, 72
        %v1029 = vld [vmem:[%s1028] sm:$0x3]
        %1031 = vset.pattern.permute.xlu0 0
        %1032 = vperm.xlu0 %1031, %v1029
        %v1033 = vpop.permute.xlu0 %1032
        %v1035 = vmul.f32 %v1026, %v1033
        %v1036 = vmul.f32 %v1027, %v1033
        %v1037 = vmul.f32 %v1035, %v257
        %v1038 = vmul.f32 %v1036, %v258
        %v1039 = vadd.f32 %v1020, %v1037
        %v1040 = vadd.f32 %v1021, %v1038
        %1041 = vrot.lane.b32.xlu0 %v1026, 127
        %v1042 = vpop.permute.xlu0 %1041
        %1043 = vrot.lane.b32.xlu0 %v1027, 127
        %v1044 = vpop.permute.xlu0 %1043
        %v1045 = vsel %vm242, %v1042, %v1044
        %v1046 = vsel %vm242, %v1044, %v1042
        %s1047 = scalar_lea.vmem %s2, 74
        %v1048 = vld [vmem:[%s1047] sm:$0x3]
        %1050 = vset.pattern.permute.xlu0 0
        %1051 = vperm.xlu0 %1050, %v1048
        %v1052 = vpop.permute.xlu0 %1051
        %v1054 = vmul.f32 %v1045, %v1052
        %v1055 = vmul.f32 %v1046, %v1052
        %v1056 = vmul.f32 %v1054, %v283
        %v1057 = vmul.f32 %v1055, %v284
        %v1058 = vadd.f32 %v1039, %v1056
        %v1059 = vadd.f32 %v1040, %v1057
        %1060 = vrot.lane.b32.xlu0 %v1045, 127
        %v1061 = vpop.permute.xlu0 %1060
        %1062 = vrot.lane.b32.xlu0 %v1046, 127
        %v1063 = vpop.permute.xlu0 %1062
        %v1064 = vsel %vm242, %v1061, %v1063
        %v1065 = vsel %vm242, %v1063, %v1061
        %s1066 = scalar_lea.vmem %s2, 76
        %v1067 = vld [vmem:[%s1066] sm:$0x3]
        %1069 = vset.pattern.permute.xlu0 0
        %1070 = vperm.xlu0 %1069, %v1067
        %v1071 = vpop.permute.xlu0 %1070
        %v1073 = vmul.f32 %v1064, %v1071
        %v1074 = vmul.f32 %v1065, %v1071
        %v1075 = vmul.f32 %v1073, %v309
        %v1076 = vmul.f32 %v1074, %v310
        %v1077 = vadd.f32 %v1058, %v1075
        %v1078 = vadd.f32 %v1059, %v1076
        %1079 = vrot.lane.b32.xlu0 %v1064, 127
        %v1080 = vpop.permute.xlu0 %1079
        %1081 = vrot.lane.b32.xlu0 %v1065, 127
        %v1082 = vpop.permute.xlu0 %1081
        %v1083 = vsel %vm242, %v1080, %v1082
        %v1084 = vsel %vm242, %v1082, %v1080
        %s1085 = scalar_lea.vmem %s2, 78
        %v1086 = vld [vmem:[%s1085] sm:$0x3]
        %1088 = vset.pattern.permute.xlu0 0
        %1089 = vperm.xlu0 %1088, %v1086
        %v1090 = vpop.permute.xlu0 %1089
        %v1092 = vmul.f32 %v1083, %v1090
        %v1093 = vmul.f32 %v1084, %v1090
        %v1094 = vmul.f32 %v1092, %v335
        %v1095 = vmul.f32 %v1093, %v336
        %v1096 = vadd.f32 %v1077, %v1094
        %v1097 = vadd.f32 %v1078, %v1095
        %1098 = vrot.lane.b32.xlu0 %v1083, 127
        %v1099 = vpop.permute.xlu0 %1098
        %1100 = vrot.lane.b32.xlu0 %v1084, 127
        %v1101 = vpop.permute.xlu0 %1100
        %v1102 = vsel %vm242, %v1099, %v1101
        %v1103 = vsel %vm242, %v1101, %v1099
        %s1104 = scalar_lea.vmem %s2, 80
        %v1105 = vld [vmem:[%s1104] sm:$0x3]
        %1107 = vset.pattern.permute.xlu0 0
        %1108 = vperm.xlu0 %1107, %v1105
        %v1109 = vpop.permute.xlu0 %1108
        %v1111 = vmul.f32 %v1102, %v1109
        %v1112 = vmul.f32 %v1103, %v1109
        %v1113 = vmul.f32 %v1111, %v361
        %v1114 = vmul.f32 %v1112, %v362
        %v1115 = vadd.f32 %v1096, %v1113
        %v1116 = vadd.f32 %v1097, %v1114
        %1117 = vrot.lane.b32.xlu0 %v1102, 127
        %v1118 = vpop.permute.xlu0 %1117
        %1119 = vrot.lane.b32.xlu0 %v1103, 127
        %v1120 = vpop.permute.xlu0 %1119
        %v1121 = vsel %vm242, %v1118, %v1120
        %v1122 = vsel %vm242, %v1120, %v1118
        %s1123 = scalar_lea.vmem %s2, 82
        %v1124 = vld [vmem:[%s1123] sm:$0x3]
        %1126 = vset.pattern.permute.xlu0 0
        %1127 = vperm.xlu0 %1126, %v1124
        %v1128 = vpop.permute.xlu0 %1127
        %v1130 = vmul.f32 %v1121, %v1128
        %v1131 = vmul.f32 %v1122, %v1128
        %v1132 = vmul.f32 %v1130, %v387
        %v1133 = vmul.f32 %v1131, %v388
        %v1134 = vadd.f32 %v1115, %v1132
        %v1135 = vadd.f32 %v1116, %v1133
        %1136 = vrot.lane.b32.xlu0 %v992, 112
        %v1137 = vpop.permute.xlu0 %1136
        %1138 = vrot.lane.b32.xlu0 %v993, 112
        %v1139 = vpop.permute.xlu0 %1138
        %v1140 = vsel %vm399, %v1137, %v1139
        %v1141 = vsel %vm399, %v1139, %v1137
        %s1142 = scalar_lea.vmem %s1, 6
        %v1143 = vld [vmem:[%s1142] ss:$8 sm:$0x3]
        %v1145 = vperm.slane %v1143, 0
        %v1146 = vperm.slane %v1143, 1
        %v1149 = vmul.f32 %v1140, %v1145
        %v1150 = vmul.f32 %v1141, %v1146
        %1151 = vrot.lane.b32.xlu0 %v1149, 3
        %v1152 = vpop.permute.xlu0 %1151
        %1153 = vrot.lane.b32.xlu0 %v1150, 3
        %v1154 = vpop.permute.xlu0 %1153
        %v1155 = vsel %vm216, %v1152, %v1154
        %v1156 = vsel %vm216, %v1154, %v1152
        %s1157 = scalar_lea.vmem %s2, 84
        %v1158 = vld [vmem:[%s1157] sm:$0x3]
        %1160 = vset.pattern.permute.xlu0 0
        %1161 = vperm.xlu0 %1160, %v1158
        %v1162 = vpop.permute.xlu0 %1161
        %v1164 = vmul.f32 %v1156, %v1162
        %v1165 = vmul.f32 %v1155, %v1162
        %v1166 = vmul.f32 %v1164, %v230
        %v1167 = vmul.f32 %v1165, %v231
        %v1168 = vadd.f32 %v1134, %v1166
        %v1169 = vadd.f32 %v1135, %v1167
        %1170 = vrot.lane.b32.xlu0 %v1156, 127
        %v1171 = vpop.permute.xlu0 %1170
        %1172 = vrot.lane.b32.xlu0 %v1155, 127
        %v1173 = vpop.permute.xlu0 %1172
        %v1174 = vsel %vm242, %v1171, %v1173
        %v1175 = vsel %vm242, %v1173, %v1171
        %s1176 = scalar_lea.vmem %s2, 86
        %v1177 = vld [vmem:[%s1176] sm:$0x3]
        %1179 = vset.pattern.permute.xlu0 0
        %1180 = vperm.xlu0 %1179, %v1177
        %v1181 = vpop.permute.xlu0 %1180
        %v1183 = vmul.f32 %v1174, %v1181
        %v1184 = vmul.f32 %v1175, %v1181
        %v1185 = vmul.f32 %v1183, %v257
        %v1186 = vmul.f32 %v1184, %v258
        %v1187 = vadd.f32 %v1168, %v1185
        %v1188 = vadd.f32 %v1169, %v1186
        %1189 = vrot.lane.b32.xlu0 %v1174, 127
        %v1190 = vpop.permute.xlu0 %1189
        %1191 = vrot.lane.b32.xlu0 %v1175, 127
        %v1192 = vpop.permute.xlu0 %1191
        %v1193 = vsel %vm242, %v1190, %v1192
        %v1194 = vsel %vm242, %v1192, %v1190
        %s1195 = scalar_lea.vmem %s2, 88
        %v1196 = vld [vmem:[%s1195] sm:$0x3]
        %1198 = vset.pattern.permute.xlu0 0
        %1199 = vperm.xlu0 %1198, %v1196
        %v1200 = vpop.permute.xlu0 %1199
        %v1202 = vmul.f32 %v1193, %v1200
        %v1203 = vmul.f32 %v1194, %v1200
        %v1204 = vmul.f32 %v1202, %v283
        %v1205 = vmul.f32 %v1203, %v284
        %v1206 = vadd.f32 %v1187, %v1204
        %v1207 = vadd.f32 %v1188, %v1205
        %1208 = vrot.lane.b32.xlu0 %v1193, 127
        %v1209 = vpop.permute.xlu0 %1208
        %1210 = vrot.lane.b32.xlu0 %v1194, 127
        %v1211 = vpop.permute.xlu0 %1210
        %v1212 = vsel %vm242, %v1209, %v1211
        %v1213 = vsel %vm242, %v1211, %v1209
        %s1214 = scalar_lea.vmem %s2, 90
        %v1215 = vld [vmem:[%s1214] sm:$0x3]
        %1217 = vset.pattern.permute.xlu0 0
        %1218 = vperm.xlu0 %1217, %v1215
        %v1219 = vpop.permute.xlu0 %1218
        %v1221 = vmul.f32 %v1212, %v1219
        %v1222 = vmul.f32 %v1213, %v1219
        %v1223 = vmul.f32 %v1221, %v309
        %v1224 = vmul.f32 %v1222, %v310
        %v1225 = vadd.f32 %v1206, %v1223
        %v1226 = vadd.f32 %v1207, %v1224
        %1227 = vrot.lane.b32.xlu0 %v1212, 127
        %v1228 = vpop.permute.xlu0 %1227
        %1229 = vrot.lane.b32.xlu0 %v1213, 127
        %v1230 = vpop.permute.xlu0 %1229
        %v1231 = vsel %vm242, %v1228, %v1230
        %v1232 = vsel %vm242, %v1230, %v1228
        %s1233 = scalar_lea.vmem %s2, 92
        %v1234 = vld [vmem:[%s1233] sm:$0x3]
        %1236 = vset.pattern.permute.xlu0 0
        %1237 = vperm.xlu0 %1236, %v1234
        %v1238 = vpop.permute.xlu0 %1237
        %v1240 = vmul.f32 %v1231, %v1238
        %v1241 = vmul.f32 %v1232, %v1238
        %v1242 = vmul.f32 %v1240, %v335
        %v1243 = vmul.f32 %v1241, %v336
        %v1244 = vadd.f32 %v1225, %v1242
        %v1245 = vadd.f32 %v1226, %v1243
        %1246 = vrot.lane.b32.xlu0 %v1231, 127
        %v1247 = vpop.permute.xlu0 %1246
        %1248 = vrot.lane.b32.xlu0 %v1232, 127
        %v1249 = vpop.permute.xlu0 %1248
        %v1250 = vsel %vm242, %v1247, %v1249
        %v1251 = vsel %vm242, %v1249, %v1247
        %s1252 = scalar_lea.vmem %s2, 94
        %v1253 = vld [vmem:[%s1252] sm:$0x3]
        %1255 = vset.pattern.permute.xlu0 0
        %1256 = vperm.xlu0 %1255, %v1253
        %v1257 = vpop.permute.xlu0 %1256
        %v1259 = vmul.f32 %v1250, %v1257
        %v1260 = vmul.f32 %v1251, %v1257
        %v1261 = vmul.f32 %v1259, %v361
        %v1262 = vmul.f32 %v1260, %v362
        %v1263 = vadd.f32 %v1244, %v1261
        %v1264 = vadd.f32 %v1245, %v1262
        %1265 = vrot.lane.b32.xlu0 %v1250, 127
        %v1266 = vpop.permute.xlu0 %1265
        %1267 = vrot.lane.b32.xlu0 %v1251, 127
        %v1268 = vpop.permute.xlu0 %1267
        %v1269 = vsel %vm242, %v1266, %v1268
        %v1270 = vsel %vm242, %v1268, %v1266
        %s1271 = scalar_lea.vmem %s2, 96
        %v1272 = vld [vmem:[%s1271] sm:$0x3]
        %1274 = vset.pattern.permute.xlu0 0
        %1275 = vperm.xlu0 %1274, %v1272
        %v1276 = vpop.permute.xlu0 %1275
        %v1278 = vmul.f32 %v1269, %v1276
        %v1279 = vmul.f32 %v1270, %v1276
        %v1280 = vmul.f32 %v1278, %v387
        %v1281 = vmul.f32 %v1279, %v388
        %v1282 = vadd.f32 %v1263, %v1280
        %v1283 = vadd.f32 %v1264, %v1281
        %v1286 = vrot.slane %v1282, 1
        %v1287 = vrot.slane %v1283, 1
        %v1290 = vadd.f32 %v1282, %v1286
        %v1291 = vadd.f32 %v1283, %v1287
        %v1292 = vxor.u32 %v1290, 2147483648
        %v1293 = vxor.u32 %v1291, 2147483648
        %v1294 = vmul.f32 %v1292, 1.442695
        %v1295 = vpow.pop %v1294
        %v1296 = vmul.f32 %v1293, 1.442695
        %v1297 = vpow.pop %v1296
        %v1298 = vadd.f32 %v1295, 1.0
        %v1299 = vadd.f32 %v1297, 1.0
        %v1300 = vrcp.pop %v1298
        %v1301 = vmul.f32 %v1298, %v1300
        %v1302 = vsub.f32 1.0, %v1301
        %v1303 = vmul.f32 %v1300, %v1302
        %v1304 = vadd.f32 %v1300, %v1303
        %vm1305 = vweird.f32 %v1298
        %vm1306 = vweird.f32 %v1300
        %vm1307 = vmor %vm1305, %vm1306
        %v1308 = vsel %vm1307, %v1300, %v1304
        %v1309 = vand.u32 2147483647, %v1298
        %vm1310 = vcmp.eq.f32.partialorder %v1309, 8.507059e+37
        %v1311 = vand.u32 %v1298, 2147483648
        %v1312 = vor.u32 1.1754944e-38, %v1311
        %v1313 = vsel %vm1310, %v1312, %v1308
        %v1314 = vmul.f32 1.0, %v1313
        %v1315 = vrcp.pop %v1299
        %v1316 = vmul.f32 %v1299, %v1315
        %v1317 = vsub.f32 1.0, %v1316
        %v1318 = vmul.f32 %v1315, %v1317
        %v1319 = vadd.f32 %v1315, %v1318
        %vm1320 = vweird.f32 %v1299
        %vm1321 = vweird.f32 %v1315
        %vm1322 = vmor %vm1320, %vm1321
        %v1323 = vsel %vm1322, %v1315, %v1319
        %v1324 = vand.u32 2147483647, %v1299
        %vm1325 = vcmp.eq.f32.partialorder %v1324, 8.507059e+37
        %v1326 = vand.u32 %v1299, 2147483648
        %v1327 = vor.u32 1.1754944e-38, %v1326
        %v1328 = vsel %vm1325, %v1327, %v1323
        %v1329 = vmul.f32 1.0, %v1328
        %v1330 = vmul.f32 %v1314, %v1290
        %v1331 = vmul.f32 %v1329, %v1291
        %v1334 = vrot.slane %v1331, 7
        %v1335 = vsel %vm192, %v1330, %v1334
        %v1337 = vlaneseq
        %vm1338 = vcmp.ge.s32.totalorder %v1337, 0
        %vm1339 = vcmp.lt.s32.totalorder %v1337, 256
        %vm1340 = vmand %vm1338, %vm1339
        %1341 = vst.msk [vmem:[%s163] sm:$0x3] %vm1340, %v1335
        %s1342 = sand.u32 %s93, 1
        %s1343 = scalar_lea.sflag [#allocation3], %s1342
        %s1344 = sand.u32 %s93, 1
        %s1345 = smul.addr %s1344, 2
        %s1346 = scalar_lea.vmem [#allocation2], %s1345
        // Predicated region
        $region33: #{tpu_custom_call.1} parent=31 // pred_check
          %p1347 = pneg %p103
        $region34: #{tpu_custom_call.1} parent=31 // pred_check_branch
          %1349 = sbr.rel (%p1347) target = $region36
        $region35: #{tpu_custom_call.1} parent=31 // pred_region
          %1351 = vsyncadd %s1343, 0
          %s1352 = smul.addr %s17, 2
          %s1353 = scalar_lea.hbm %s3, %s1352
          %s1355 = sshll.u32 %s1346, 4
          %s1356 = int_to_ptr.vmem [resolvable:$true] %s1355
          %s1357 = sshll.u32 %s1353, 4
          %s1358 = int_to_ptr.hbm [resolvable:$true] %s1357
          %1360 = dma.vmem_to_hbm [thread:$0]  %s1356, 32, %s1358, %s1343
        $region36: #{tpu_custom_call.1} parent=31 // pred_fallthru
          _
      $region32: #{tpu_custom_call.1} parent=5 // pred_fallthru
        _
      %p1361 = scmp.le.s32.totalorder 2, %s12
      // Predicated region
      $region37: #{tpu_custom_call.1} parent=5 // pred_check
        %p1362 = pneg %p1361
      $region38: #{tpu_custom_call.1} parent=5 // pred_check_branch
        %1364 = sbr.rel (%p1362) target = $region40
      $region39: #{tpu_custom_call.1} parent=5 // pred_region
        %s1365 = ssub.s32 %s12, 2
        // Predicated region
        $region41: #{tpu_custom_call.1} parent=39 // pred_check
          %p1366 = pneg %p109
        $region42: #{tpu_custom_call.1} parent=39 // pred_check_branch
          %1368 = sbr.rel (%p1366) target = $region44
        $region43: #{tpu_custom_call.1} parent=39 // pred_region
          %s1369 = sand.u32 %s94, 1
          %s1370 = scalar_lea.sflag [#allocation3], %s1369
          %s1371 = sand.u32 %s94, 1
          %s1372 = smul.addr %s1371, 2
          %s1373 = scalar_lea.vmem [#allocation2], %s1372
          %1375 = dma.done %s1370, 32
        $region44: #{tpu_custom_call.1} parent=39 // pred_fallthru
          _
      $region40: #{tpu_custom_call.1} parent=5 // pred_fallthru
        _
    $region6: #{tpu_custom_call.1} parent=1 // loop_footer
      %s16 = sadd.s32 1, %s12
    $region7: #{tpu_custom_call.1} parent=1 // loop_footer_branch
      %11 = sbr.rel target = $region3
    $region8: #{tpu_custom_call.1} parent=1 // loop_exit
      _
    %1376 = vsyncpa [#allocation3], 1
    %s1377 = scalar_lea.sflag [#allocation3], 1
    %1378 = vsyncpa %s1377, 1

</llo_original>
